<compile_context>
chip_gen: v7x
topology: tpu7x:2x2x1
jax: 0.10.0
libtpu: 0.0.40
codegen_flags: <defaults>
</compile_context>

<pallas_src>
import functools
import math

import jax
import jax.numpy as jnp
from jax.experimental import pallas as pl
from jax.experimental.pallas import tpu as pltpu


def _transformer_layer_kernel(x_ref,      # (BN, L, E)  block of batch elements
                              wqt_ref,    # (E, E)   (Wi_q @ Wq)^T
                              wkt_ref,    # (E, E)   (Wi_k @ Wk)^T
                              wvt_ref,    # (E, E)   (Wi_v @ Wv)^T
                              bq_ref,     # (1, E)
                              bk_ref,     # (1, E)
                              bv_ref,     # (1, E)
                              wot_ref,    # (E, E)   out_proj.weight^T
                              bo_ref,     # (1, E)
                              wfft_ref,   # (E, E)   (fc2 @ fc1)^T
                              o_ref,      # (BN, L, E)
                              *, num_heads: int):
    f32 = jnp.float32
    BN, L, E = x_ref.shape
    Dh = E // num_heads
    scale = 1.0 / math.sqrt(Dh)

    x3 = x_ref[...].astype(f32)                       # (BN, L, E)
    x2d = x3.reshape(BN * L, E)                       # leading-dim merge (free)

    # Folded q/k/v -> in_proj projections; weights already transposed on host.
    qin = jnp.dot(x2d, wqt_ref[...], preferred_element_type=f32) + bq_ref[...]
    kin = jnp.dot(x2d, wkt_ref[...], preferred_element_type=f32) + bk_ref[...]
    vin = jnp.dot(x2d, wvt_ref[...], preferred_element_type=f32) + bv_ref[...]

    q3 = (qin * scale).reshape(BN, L, E)
    k3 = kin.reshape(BN, L, E)
    v3 = vin.reshape(BN, L, E)

    # Per-head attention via full-width batched einsums + lane masks.
    # Masking the contracted (lane) axis of q restricts the dot product to the
    # head's Dh columns, so s is exactly that head's (L, L) score matrix; the
    # head output is then selected back with the same mask.  This avoids
    # sub-lane slices, head concatenation and padded (8,8) MXU calls.
    lane = jax.lax.broadcasted_iota(jnp.int32, (1, 1, E), 2)
    attn = jnp.zeros((BN, L, E), f32)
    for h in range(num_heads):                        # static unroll, H small
        lo, hi = h * Dh, (h + 1) * Dh
        mask = jnp.where((lane >= lo) & (lane < hi),
                         jnp.float32(1.0), jnp.float32(0.0))   # (1, 1, E)
        qh = q3 * mask
        s = jnp.einsum('ble,bme->blm', qh, k3,
                       preferred_element_type=f32)             # (BN, L, L)
        m = jnp.max(s, axis=-1, keepdims=True)
        e = jnp.exp(s - m)
        inv = pl.reciprocal(jnp.sum(e, axis=-1, keepdims=True), approx=True)
        p = e * inv
        oh = jnp.einsum('blm,bme->ble', p, v3,
                        preferred_element_type=f32)            # (BN, L, E)
        attn = attn + oh * mask

    # out_proj + residual, then folded FFN (fc2 @ fc1) + residual.
    attn2d = attn.reshape(BN * L, E)
    x1 = jnp.dot(attn2d, wot_ref[...], preferred_element_type=f32) \
         + bo_ref[...] + x2d
    x2 = jnp.dot(x1, wfft_ref[...], preferred_element_type=f32) + x1

    o_ref[...] = x2.reshape(BN, L, E).astype(o_ref.dtype)


def transformer_layer(x, params, num_heads, block_n=None):
    """x: (L, N, E) float32, PyTorch MultiheadAttention layout."""
    L, N, E = x.shape
    assert E % num_heads == 0, "embed dim must be divisible by num_heads"

    x_nle = jnp.transpose(x, (1, 0, 2))               # (N, L, E) kernel layout

    # --- host-side weight folding (exact up to f32 rounding) ---------------
    wi = params["in_proj_w"]                          # (3E, E)
    bi = params["in_proj_b"]                          # (1, 3E)
    wqt = jnp.dot(wi[0:E], params["wq"]).T            # (E, E)
    wkt = jnp.dot(wi[E:2 * E], params["wk"]).T
    wvt = jnp.dot(wi[2 * E:3 * E], params["wv"]).T
    bq, bk, bv = bi[:, 0:E], bi[:, E:2 * E], bi[:, 2 * E:3 * E]
    wot = params["out_proj_w"].T
    bo = params["out_proj_b"]
    wfft = jnp.dot(params["fc2"], params["fc1"]).T    # fc2(fc1(x)) == x @ wfft

    # --- batch blocking: aim for ~128 rows per step, whole batch if small --
    if block_n is None:
        target = max(1, 128 // L)
        block_n = max(d for d in range(1, min(N, target) + 1) if N % d == 0)
    assert N % block_n == 0
    grid = (N // block_n,)

    def wspec(shape):
        return pl.BlockSpec(shape, lambda b: (0,) * len(shape))

    flops = 2 * N * L * E * E * 5 + 4 * N * L * L * E
    bytes_accessed = 4 * (2 * N * L * E + 5 * E * E + 4 * E)
    cost = pl.CostEstimate(flops=flops,
                           transcendentals=N * num_heads * L * L,
                           bytes_accessed=bytes_accessed)

    out = pl.pallas_call(
        functools.partial(_transformer_layer_kernel, num_heads=num_heads),
        out_shape=jax.ShapeDtypeStruct((N, L, E), x.dtype),
        grid_spec=pltpu.PrefetchScalarGridSpec(
            num_scalar_prefetch=0,
            grid=grid,
            in_specs=[
                pl.BlockSpec((block_n, L, E), lambda b: (b, 0, 0)),   # x
                wspec((E, E)),            # (Wi_q @ Wq)^T
                wspec((E, E)),            # (Wi_k @ Wk)^T
                wspec((E, E)),            # (Wi_v @ Wv)^T
                wspec((1, E)),            # b_q
                wspec((1, E)),            # b_k
                wspec((1, E)),            # b_v
                wspec((E, E)),            # out_proj^T
                wspec((1, E)),            # out_proj bias
                wspec((E, E)),            # (fc2 @ fc1)^T
            ],
            out_specs=pl.BlockSpec((block_n, L, E), lambda b: (b, 0, 0)),
        ),
        compiler_params=pltpu.CompilerParams(
            dimension_semantics=("parallel",)),
        cost_estimate=cost,
    )(x_nle, wqt, wkt, wvt, bq, bk, bv, wot, bo, wfft)

    return jnp.transpose(out, (1, 0, 2))              # back to (L, N, E)


def _reference_forward(x, params, num_heads):
    """Pure-JAX reference replicating the PyTorch module's math (unfolded)."""
    L, N, E = x.shape
    Dh = E // num_heads
    scale = 1.0 / math.sqrt(Dh)

    def per_batch(xb):                                # xb: (L, E)
        q = xb @ params["wq"].T
        k = xb @ params["wk"].T
        v = xb @ params["wv"].T
        wi, bi = params["in_proj_w"], params["in_proj_b"][0]
        qin = q @ wi[0:E].T + bi[0:E]
        kin = k @ wi[E:2 * E].T + bi[E:2 * E]
        vin = v @ wi[2 * E:3 * E].T + bi[2 * E:3 * E]
        qh = qin.reshape(L, num_heads, Dh).transpose(1, 0, 2) * scale
        kh = kin.reshape(L, num_heads, Dh).transpose(1, 0, 2)
        vh = vin.reshape(L, num_heads, Dh).transpose(1, 0, 2)
        s = jnp.einsum("hqd,hkd->hqk", qh, kh)
        p = jax.nn.softmax(s, axis=-1)
        attn = jnp.einsum("hqk,hkd->hqd", p, vh).transpose(1, 0, 2).reshape(L, E)
        ao = attn @ params["out_proj_w"].T + params["out_proj_b"][0]
        x1 = ao + xb
        return (x1 @ params["fc1"].T) @ params["fc2"].T + x1

    return jax.vmap(per_batch, in_axes=1, out_axes=1)(x)


def _init_params(key, channels):
    ks = jax.random.split(key, 8)
    scale = 0.1
    E = channels
    return {
        "wq": jax.random.normal(ks[0], (E, E), jnp.float32) * scale,
        "wk": jax.random.normal(ks[1], (E, E), jnp.float32) * scale,
        "wv": jax.random.normal(ks[2], (E, E), jnp.float32) * scale,
        "in_proj_w": jax.random.normal(ks[3], (3 * E, E), jnp.float32) * scale,
        "in_proj_b": jax.random.normal(ks[4], (1, 3 * E), jnp.float32) * scale,
        "out_proj_w": jax.random.normal(ks[5], (E, E), jnp.float32) * scale,
        "out_proj_b": jax.random.normal(ks[6], (1, E), jnp.float32) * scale,
        "fc1": jax.random.normal(ks[7], (E, E), jnp.float32) * scale,
        "fc2": jax.random.normal(jax.random.fold_in(key, 99), (E, E), jnp.float32) * scale,
    }


if __name__ == "__main__":
    channels = 32
    num_heads = 4
    seq = 8
    batch = 2

    key = jax.random.PRNGKey(0)
    k_x, k_p = jax.random.split(key)
    x = jax.random.normal(k_x, (seq, batch, channels), jnp.float32)
    params = _init_params(k_p, channels)

    out = jax.block_until_ready(transformer_layer(x, params, num_heads))

    ref = _reference_forward(x, params, num_heads)
    assert out.shape == (seq, batch, channels)
    # Tolerance 1e-3: weight folding and the approx (EUP) softmax reciprocal
    # change rounding slightly vs. the unfolded f32 reference.
    assert jnp.allclose(out, ref, atol=1e-3, rtol=1e-3), \
        float(jnp.max(jnp.abs(out - ref)))

    print("KERNEL_OK")
</pallas_src>

<mosaic_0001>
module attributes {stable_mosaic.version = 11 : i64} {
  func.func @_transformer_layer_kernel(%arg0: i32, %arg1: memref<2x8x32xf32, #tpu.memory_space<vmem>>, %arg2: memref<32x32xf32, #tpu.memory_space<vmem>>, %arg3: memref<32x32xf32, #tpu.memory_space<vmem>>, %arg4: memref<32x32xf32, #tpu.memory_space<vmem>>, %arg5: memref<1x32xf32, #tpu.memory_space<vmem>>, %arg6: memref<1x32xf32, #tpu.memory_space<vmem>>, %arg7: memref<1x32xf32, #tpu.memory_space<vmem>>, %arg8: memref<32x32xf32, #tpu.memory_space<vmem>>, %arg9: memref<1x32xf32, #tpu.memory_space<vmem>>, %arg10: memref<32x32xf32, #tpu.memory_space<vmem>>, %arg11: memref<2x8x32xf32, #tpu.memory_space<vmem>>) attributes {dimension_semantics = [#tpu.dimension_semantics<parallel>], iteration_bounds = array<i64: 1>, scalar_prefetch = 0 : i64, scratch_operands = 0 : i64, tpu.core_type = #tpu.core_type<tc>, window_params = [{transform_indices = @transform_0, window_bounds = array<i64: 2, 8, 32>}, {pipeline_mode = #tpu.pipeline_mode<synchronous>, transform_indices = @transform_1, window_bounds = array<i64: 32, 32>}, {pipeline_mode = #tpu.pipeline_mode<synchronous>, transform_indices = @transform_2, window_bounds = array<i64: 32, 32>}, {pipeline_mode = #tpu.pipeline_mode<synchronous>, transform_indices = @transform_3, window_bounds = array<i64: 32, 32>}, {pipeline_mode = #tpu.pipeline_mode<synchronous>, transform_indices = @transform_4, window_bounds = array<i64: 1, 32>}, {pipeline_mode = #tpu.pipeline_mode<synchronous>, transform_indices = @transform_5, window_bounds = array<i64: 1, 32>}, {pipeline_mode = #tpu.pipeline_mode<synchronous>, transform_indices = @transform_6, window_bounds = array<i64: 1, 32>}, {pipeline_mode = #tpu.pipeline_mode<synchronous>, transform_indices = @transform_7, window_bounds = array<i64: 32, 32>}, {pipeline_mode = #tpu.pipeline_mode<synchronous>, transform_indices = @transform_8, window_bounds = array<i64: 1, 32>}, {pipeline_mode = #tpu.pipeline_mode<synchronous>, transform_indices = @transform_9, window_bounds = array<i64: 32, 32>}, {transform_indices = @transform_10, window_bounds = array<i64: 2, 8, 32>}]} {
    %c0 = arith.constant 0 : index
    %c0_0 = arith.constant 0 : index
    %c0_1 = arith.constant 0 : index
    %0 = vector.load %arg1[%c0, %c0_0, %c0_1] : memref<2x8x32xf32, #tpu.memory_space<vmem>>, vector<2x8x32xf32>
    %1 = vector.shape_cast %0 : vector<2x8x32xf32> to vector<16x32xf32>
    %c0_2 = arith.constant 0 : index
    %c0_3 = arith.constant 0 : index
    %2 = vector.load %arg2[%c0_2, %c0_3] : memref<32x32xf32, #tpu.memory_space<vmem>>, vector<32x32xf32>
    %cst = arith.constant dense<0.000000e+00> : vector<16x32xf32>
    %3 = tpu.matmul %1, %2, %cst {dimension_numbers = #tpu.dot_dimension_numbers<[1], [0], [0], [1], [0, 0, 1, 1], [], []>} : vector<16x32xf32>, vector<32x32xf32>, vector<16x32xf32> -> vector<16x32xf32>
    %c0_4 = arith.constant 0 : index
    %c0_5 = arith.constant 0 : index
    %4 = vector.load %arg5[%c0_4, %c0_5] : memref<1x32xf32, #tpu.memory_space<vmem>>, vector<1x32xf32>
    %5 = vector.broadcast %4 : vector<1x32xf32> to vector<16x32xf32>
    %6 = arith.addf %3, %5 : vector<16x32xf32>
    %c0_6 = arith.constant 0 : index
    %c0_7 = arith.constant 0 : index
    %7 = vector.load %arg3[%c0_6, %c0_7] : memref<32x32xf32, #tpu.memory_space<vmem>>, vector<32x32xf32>
    %cst_8 = arith.constant dense<0.000000e+00> : vector<16x32xf32>
    %8 = tpu.matmul %1, %7, %cst_8 {dimension_numbers = #tpu.dot_dimension_numbers<[1], [0], [0], [1], [0, 0, 1, 1], [], []>} : vector<16x32xf32>, vector<32x32xf32>, vector<16x32xf32> -> vector<16x32xf32>
    %c0_9 = arith.constant 0 : index
    %c0_10 = arith.constant 0 : index
    %9 = vector.load %arg6[%c0_9, %c0_10] : memref<1x32xf32, #tpu.memory_space<vmem>>, vector<1x32xf32>
    %10 = vector.broadcast %9 : vector<1x32xf32> to vector<16x32xf32>
    %11 = arith.addf %8, %10 : vector<16x32xf32>
    %c0_11 = arith.constant 0 : index
    %c0_12 = arith.constant 0 : index
    %12 = vector.load %arg4[%c0_11, %c0_12] : memref<32x32xf32, #tpu.memory_space<vmem>>, vector<32x32xf32>
    %cst_13 = arith.constant dense<0.000000e+00> : vector<16x32xf32>
    %13 = tpu.matmul %1, %12, %cst_13 {dimension_numbers = #tpu.dot_dimension_numbers<[1], [0], [0], [1], [0, 0, 1, 1], [], []>} : vector<16x32xf32>, vector<32x32xf32>, vector<16x32xf32> -> vector<16x32xf32>
    %c0_14 = arith.constant 0 : index
    %c0_15 = arith.constant 0 : index
    %14 = vector.load %arg7[%c0_14, %c0_15] : memref<1x32xf32, #tpu.memory_space<vmem>>, vector<1x32xf32>
    %15 = vector.broadcast %14 : vector<1x32xf32> to vector<16x32xf32>
    %16 = arith.addf %13, %15 : vector<16x32xf32>
    %cst_16 = arith.constant 0.353553385 : f32
    %17 = vector.broadcast %cst_16 : f32 to vector<16x32xf32>
    %18 = arith.mulf %6, %17 : vector<16x32xf32>
    %19 = vector.shape_cast %18 : vector<16x32xf32> to vector<2x8x32xf32>
    %20 = vector.shape_cast %11 : vector<16x32xf32> to vector<2x8x32xf32>
    %21 = vector.shape_cast %16 : vector<16x32xf32> to vector<2x8x32xf32>
    %22 = tpu.iota {dimensions = array<i32: 2>} : vector<1x1x32xi32>
    %cst_17 = arith.constant 0.000000e+00 : f32
    %23 = vector.broadcast %cst_17 : f32 to vector<2x8x32xf32>
    %c0_i32 = arith.constant 0 : i32
    %24 = vector.broadcast %c0_i32 : i32 to vector<1x1x32xi32>
    %25 = arith.cmpi sge, %22, %24 : vector<1x1x32xi32>
    %c8_i32 = arith.constant 8 : i32
    %26 = vector.broadcast %c8_i32 : i32 to vector<1x1x32xi32>
    %27 = arith.cmpi slt, %22, %26 : vector<1x1x32xi32>
    %28 = arith.andi %25, %27 : vector<1x1x32xi1>
    %cst_18 = arith.constant 1.000000e+00 : f32
    %cst_19 = arith.constant 0.000000e+00 : f32
    %29 = vector.broadcast %cst_18 : f32 to vector<1x1x32xf32>
    %30 = vector.broadcast %cst_19 : f32 to vector<1x1x32xf32>
    %31 = arith.select %28, %29, %30 : vector<1x1x32xi1>, vector<1x1x32xf32>
    %32 = vector.broadcast %31 : vector<1x1x32xf32> to vector<2x8x32xf32>
    %33 = arith.mulf %19, %32 : vector<2x8x32xf32>
    "tpu.trace_start"() <{level = 10 : i32, message = "ble,bme->blm"}> : () -> ()
    %cst_20 = arith.constant dense<0.000000e+00> : vector<2x8x8xf32>
    %34 = tpu.matmul %33, %20, %cst_20 {dimension_numbers = #tpu.dot_dimension_numbers<[2], [2], [1], [1], [0, 0, 0, 1, 1, 1], [0], [0]>} : vector<2x8x32xf32>, vector<2x8x32xf32>, vector<2x8x8xf32> -> vector<2x8x8xf32>
    "tpu.trace_stop"() : () -> ()
    %cst_21 = arith.constant dense<0xFF800000> : vector<2x8xf32>
    %35 = vector.multi_reduction <maximumf>, %34, %cst_21 [2] : vector<2x8x8xf32> to vector<2x8xf32>
    %36 = vector.shape_cast %35 : vector<2x8xf32> to vector<2x8x1xf32>
    %37 = vector.broadcast %36 : vector<2x8x1xf32> to vector<2x8x8xf32>
    %38 = arith.subf %34, %37 : vector<2x8x8xf32>
    %39 = math.exp %38 : vector<2x8x8xf32>
    %cst_22 = arith.constant dense<0.000000e+00> : vector<2x8xf32>
    %40 = vector.multi_reduction <add>, %39, %cst_22 [2] : vector<2x8x8xf32> to vector<2x8xf32>
    %41 = vector.shape_cast %40 : vector<2x8xf32> to vector<2x8x1xf32>
    %42 = tpu.reciprocal %41 {approx = true} : vector<2x8x1xf32> -> vector<2x8x1xf32>
    %43 = vector.broadcast %42 : vector<2x8x1xf32> to vector<2x8x8xf32>
    %44 = arith.mulf %39, %43 : vector<2x8x8xf32>
    "tpu.trace_start"() <{level = 10 : i32, message = "blm,bme->ble"}> : () -> ()
    %cst_23 = arith.constant dense<0.000000e+00> : vector<2x8x32xf32>
    %45 = tpu.matmul %44, %21, %cst_23 {dimension_numbers = #tpu.dot_dimension_numbers<[2], [1], [1], [2], [0, 0, 0, 1, 1, 2], [0], [0]>} : vector<2x8x8xf32>, vector<2x8x32xf32>, vector<2x8x32xf32> -> vector<2x8x32xf32>
    "tpu.trace_stop"() : () -> ()
    %46 = vector.broadcast %31 : vector<1x1x32xf32> to vector<2x8x32xf32>
    %47 = arith.mulf %45, %46 : vector<2x8x32xf32>
    %48 = arith.addf %23, %47 : vector<2x8x32xf32>
    %c8_i32_24 = arith.constant 8 : i32
    %49 = vector.broadcast %c8_i32_24 : i32 to vector<1x1x32xi32>
    %50 = arith.cmpi sge, %22, %49 : vector<1x1x32xi32>
    %c16_i32 = arith.constant 16 : i32
    %51 = vector.broadcast %c16_i32 : i32 to vector<1x1x32xi32>
    %52 = arith.cmpi slt, %22, %51 : vector<1x1x32xi32>
    %53 = arith.andi %50, %52 : vector<1x1x32xi1>
    %cst_25 = arith.constant 1.000000e+00 : f32
    %cst_26 = arith.constant 0.000000e+00 : f32
    %54 = vector.broadcast %cst_25 : f32 to vector<1x1x32xf32>
    %55 = vector.broadcast %cst_26 : f32 to vector<1x1x32xf32>
    %56 = arith.select %53, %54, %55 : vector<1x1x32xi1>, vector<1x1x32xf32>
    %57 = vector.broadcast %56 : vector<1x1x32xf32> to vector<2x8x32xf32>
    %58 = arith.mulf %19, %57 : vector<2x8x32xf32>
    "tpu.trace_start"() <{level = 10 : i32, message = "ble,bme->blm"}> : () -> ()
    %cst_27 = arith.constant dense<0.000000e+00> : vector<2x8x8xf32>
    %59 = tpu.matmul %58, %20, %cst_27 {dimension_numbers = #tpu.dot_dimension_numbers<[2], [2], [1], [1], [0, 0, 0, 1, 1, 1], [0], [0]>} : vector<2x8x32xf32>, vector<2x8x32xf32>, vector<2x8x8xf32> -> vector<2x8x8xf32>
    "tpu.trace_stop"() : () -> ()
    %cst_28 = arith.constant dense<0xFF800000> : vector<2x8xf32>
    %60 = vector.multi_reduction <maximumf>, %59, %cst_28 [2] : vector<2x8x8xf32> to vector<2x8xf32>
    %61 = vector.shape_cast %60 : vector<2x8xf32> to vector<2x8x1xf32>
    %62 = vector.broadcast %61 : vector<2x8x1xf32> to vector<2x8x8xf32>
    %63 = arith.subf %59, %62 : vector<2x8x8xf32>
    %64 = math.exp %63 : vector<2x8x8xf32>
    %cst_29 = arith.constant dense<0.000000e+00> : vector<2x8xf32>
    %65 = vector.multi_reduction <add>, %64, %cst_29 [2] : vector<2x8x8xf32> to vector<2x8xf32>
    %66 = vector.shape_cast %65 : vector<2x8xf32> to vector<2x8x1xf32>
    %67 = tpu.reciprocal %66 {approx = true} : vector<2x8x1xf32> -> vector<2x8x1xf32>
    %68 = vector.broadcast %67 : vector<2x8x1xf32> to vector<2x8x8xf32>
    %69 = arith.mulf %64, %68 : vector<2x8x8xf32>
    "tpu.trace_start"() <{level = 10 : i32, message = "blm,bme->ble"}> : () -> ()
    %cst_30 = arith.constant dense<0.000000e+00> : vector<2x8x32xf32>
    %70 = tpu.matmul %69, %21, %cst_30 {dimension_numbers = #tpu.dot_dimension_numbers<[2], [1], [1], [2], [0, 0, 0, 1, 1, 2], [0], [0]>} : vector<2x8x8xf32>, vector<2x8x32xf32>, vector<2x8x32xf32> -> vector<2x8x32xf32>
    "tpu.trace_stop"() : () -> ()
    %71 = vector.broadcast %56 : vector<1x1x32xf32> to vector<2x8x32xf32>
    %72 = arith.mulf %70, %71 : vector<2x8x32xf32>
    %73 = arith.addf %48, %72 : vector<2x8x32xf32>
    %c16_i32_31 = arith.constant 16 : i32
    %74 = vector.broadcast %c16_i32_31 : i32 to vector<1x1x32xi32>
    %75 = arith.cmpi sge, %22, %74 : vector<1x1x32xi32>
    %c24_i32 = arith.constant 24 : i32
    %76 = vector.broadcast %c24_i32 : i32 to vector<1x1x32xi32>
    %77 = arith.cmpi slt, %22, %76 : vector<1x1x32xi32>
    %78 = arith.andi %75, %77 : vector<1x1x32xi1>
    %cst_32 = arith.constant 1.000000e+00 : f32
    %cst_33 = arith.constant 0.000000e+00 : f32
    %79 = vector.broadcast %cst_32 : f32 to vector<1x1x32xf32>
    %80 = vector.broadcast %cst_33 : f32 to vector<1x1x32xf32>
    %81 = arith.select %78, %79, %80 : vector<1x1x32xi1>, vector<1x1x32xf32>
    %82 = vector.broadcast %81 : vector<1x1x32xf32> to vector<2x8x32xf32>
    %83 = arith.mulf %19, %82 : vector<2x8x32xf32>
    "tpu.trace_start"() <{level = 10 : i32, message = "ble,bme->blm"}> : () -> ()
    %cst_34 = arith.constant dense<0.000000e+00> : vector<2x8x8xf32>
    %84 = tpu.matmul %83, %20, %cst_34 {dimension_numbers = #tpu.dot_dimension_numbers<[2], [2], [1], [1], [0, 0, 0, 1, 1, 1], [0], [0]>} : vector<2x8x32xf32>, vector<2x8x32xf32>, vector<2x8x8xf32> -> vector<2x8x8xf32>
    "tpu.trace_stop"() : () -> ()
    %cst_35 = arith.constant dense<0xFF800000> : vector<2x8xf32>
    %85 = vector.multi_reduction <maximumf>, %84, %cst_35 [2] : vector<2x8x8xf32> to vector<2x8xf32>
    %86 = vector.shape_cast %85 : vector<2x8xf32> to vector<2x8x1xf32>
    %87 = vector.broadcast %86 : vector<2x8x1xf32> to vector<2x8x8xf32>
    %88 = arith.subf %84, %87 : vector<2x8x8xf32>
    %89 = math.exp %88 : vector<2x8x8xf32>
    %cst_36 = arith.constant dense<0.000000e+00> : vector<2x8xf32>
    %90 = vector.multi_reduction <add>, %89, %cst_36 [2] : vector<2x8x8xf32> to vector<2x8xf32>
    %91 = vector.shape_cast %90 : vector<2x8xf32> to vector<2x8x1xf32>
    %92 = tpu.reciprocal %91 {approx = true} : vector<2x8x1xf32> -> vector<2x8x1xf32>
    %93 = vector.broadcast %92 : vector<2x8x1xf32> to vector<2x8x8xf32>
    %94 = arith.mulf %89, %93 : vector<2x8x8xf32>
    "tpu.trace_start"() <{level = 10 : i32, message = "blm,bme->ble"}> : () -> ()
    %cst_37 = arith.constant dense<0.000000e+00> : vector<2x8x32xf32>
    %95 = tpu.matmul %94, %21, %cst_37 {dimension_numbers = #tpu.dot_dimension_numbers<[2], [1], [1], [2], [0, 0, 0, 1, 1, 2], [0], [0]>} : vector<2x8x8xf32>, vector<2x8x32xf32>, vector<2x8x32xf32> -> vector<2x8x32xf32>
    "tpu.trace_stop"() : () -> ()
    %96 = vector.broadcast %81 : vector<1x1x32xf32> to vector<2x8x32xf32>
    %97 = arith.mulf %95, %96 : vector<2x8x32xf32>
    %98 = arith.addf %73, %97 : vector<2x8x32xf32>
    %c24_i32_38 = arith.constant 24 : i32
    %99 = vector.broadcast %c24_i32_38 : i32 to vector<1x1x32xi32>
    %100 = arith.cmpi sge, %22, %99 : vector<1x1x32xi32>
    %c32_i32 = arith.constant 32 : i32
    %101 = vector.broadcast %c32_i32 : i32 to vector<1x1x32xi32>
    %102 = arith.cmpi slt, %22, %101 : vector<1x1x32xi32>
    %103 = arith.andi %100, %102 : vector<1x1x32xi1>
    %cst_39 = arith.constant 1.000000e+00 : f32
    %cst_40 = arith.constant 0.000000e+00 : f32
    %104 = vector.broadcast %cst_39 : f32 to vector<1x1x32xf32>
    %105 = vector.broadcast %cst_40 : f32 to vector<1x1x32xf32>
    %106 = arith.select %103, %104, %105 : vector<1x1x32xi1>, vector<1x1x32xf32>
    %107 = vector.broadcast %106 : vector<1x1x32xf32> to vector<2x8x32xf32>
    %108 = arith.mulf %19, %107 : vector<2x8x32xf32>
    "tpu.trace_start"() <{level = 10 : i32, message = "ble,bme->blm"}> : () -> ()
    %cst_41 = arith.constant dense<0.000000e+00> : vector<2x8x8xf32>
    %109 = tpu.matmul %108, %20, %cst_41 {dimension_numbers = #tpu.dot_dimension_numbers<[2], [2], [1], [1], [0, 0, 0, 1, 1, 1], [0], [0]>} : vector<2x8x32xf32>, vector<2x8x32xf32>, vector<2x8x8xf32> -> vector<2x8x8xf32>
    "tpu.trace_stop"() : () -> ()
    %cst_42 = arith.constant dense<0xFF800000> : vector<2x8xf32>
    %110 = vector.multi_reduction <maximumf>, %109, %cst_42 [2] : vector<2x8x8xf32> to vector<2x8xf32>
    %111 = vector.shape_cast %110 : vector<2x8xf32> to vector<2x8x1xf32>
    %112 = vector.broadcast %111 : vector<2x8x1xf32> to vector<2x8x8xf32>
    %113 = arith.subf %109, %112 : vector<2x8x8xf32>
    %114 = math.exp %113 : vector<2x8x8xf32>
    %cst_43 = arith.constant dense<0.000000e+00> : vector<2x8xf32>
    %115 = vector.multi_reduction <add>, %114, %cst_43 [2] : vector<2x8x8xf32> to vector<2x8xf32>
    %116 = vector.shape_cast %115 : vector<2x8xf32> to vector<2x8x1xf32>
    %117 = tpu.reciprocal %116 {approx = true} : vector<2x8x1xf32> -> vector<2x8x1xf32>
    %118 = vector.broadcast %117 : vector<2x8x1xf32> to vector<2x8x8xf32>
    %119 = arith.mulf %114, %118 : vector<2x8x8xf32>
    "tpu.trace_start"() <{level = 10 : i32, message = "blm,bme->ble"}> : () -> ()
    %cst_44 = arith.constant dense<0.000000e+00> : vector<2x8x32xf32>
    %120 = tpu.matmul %119, %21, %cst_44 {dimension_numbers = #tpu.dot_dimension_numbers<[2], [1], [1], [2], [0, 0, 0, 1, 1, 2], [0], [0]>} : vector<2x8x8xf32>, vector<2x8x32xf32>, vector<2x8x32xf32> -> vector<2x8x32xf32>
    "tpu.trace_stop"() : () -> ()
    %121 = vector.broadcast %106 : vector<1x1x32xf32> to vector<2x8x32xf32>
    %122 = arith.mulf %120, %121 : vector<2x8x32xf32>
    %123 = arith.addf %98, %122 : vector<2x8x32xf32>
    %124 = vector.shape_cast %123 : vector<2x8x32xf32> to vector<16x32xf32>
    %c0_45 = arith.constant 0 : index
    %c0_46 = arith.constant 0 : index
    %125 = vector.load %arg8[%c0_45, %c0_46] : memref<32x32xf32, #tpu.memory_space<vmem>>, vector<32x32xf32>
    %cst_47 = arith.constant dense<0.000000e+00> : vector<16x32xf32>
    %126 = tpu.matmul %124, %125, %cst_47 {dimension_numbers = #tpu.dot_dimension_numbers<[1], [0], [0], [1], [0, 0, 1, 1], [], []>} : vector<16x32xf32>, vector<32x32xf32>, vector<16x32xf32> -> vector<16x32xf32>
    %c0_48 = arith.constant 0 : index
    %c0_49 = arith.constant 0 : index
    %127 = vector.load %arg9[%c0_48, %c0_49] : memref<1x32xf32, #tpu.memory_space<vmem>>, vector<1x32xf32>
    %128 = vector.broadcast %127 : vector<1x32xf32> to vector<16x32xf32>
    %129 = arith.addf %126, %128 : vector<16x32xf32>
    %130 = arith.addf %129, %1 : vector<16x32xf32>
    %c0_50 = arith.constant 0 : index
    %c0_51 = arith.constant 0 : index
    %131 = vector.load %arg10[%c0_50, %c0_51] : memref<32x32xf32, #tpu.memory_space<vmem>>, vector<32x32xf32>
    %cst_52 = arith.constant dense<0.000000e+00> : vector<16x32xf32>
    %132 = tpu.matmul %130, %131, %cst_52 {dimension_numbers = #tpu.dot_dimension_numbers<[1], [0], [0], [1], [0, 0, 1, 1], [], []>} : vector<16x32xf32>, vector<32x32xf32>, vector<16x32xf32> -> vector<16x32xf32>
    %133 = arith.addf %132, %130 : vector<16x32xf32>
    %134 = vector.shape_cast %133 : vector<16x32xf32> to vector<2x8x32xf32>
    %c0_53 = arith.constant 0 : index
    %c0_54 = arith.constant 0 : index
    %c0_55 = arith.constant 0 : index
    %135 = vector.load %arg11[%c0_53, %c0_54, %c0_55] : memref<2x8x32xf32, #tpu.memory_space<vmem>>, vector<2x8x32xf32>
    tpu.vector_store %arg11[%c0_53, %c0_54, %c0_55], %134 {strides = array<i32>} : memref<2x8x32xf32, #tpu.memory_space<vmem>>, vector<2x8x32xf32>,
    return
  }
  func.func @transform_0(%arg0: i32) -> (i32, i32, i32) {
    %c0_i32 = arith.constant 0 : i32
    %c0_i32_0 = arith.constant 0 : i32
    %c0_i32_1 = arith.constant 0 : i32
    return %arg0, %c0_i32, %c0_i32_0 : i32, i32, i32
  }
  func.func @transform_1(%arg0: i32) -> (i32, i32) {
    %c0_i32 = arith.constant 0 : i32
    %c0_i32_0 = arith.constant 0 : i32
    %c0_i32_1 = arith.constant 0 : i32
    return %c0_i32, %c0_i32_0 : i32, i32
  }
  func.func @transform_2(%arg0: i32) -> (i32, i32) {
    %c0_i32 = arith.constant 0 : i32
    %c0_i32_0 = arith.constant 0 : i32
    %c0_i32_1 = arith.constant 0 : i32
    return %c0_i32, %c0_i32_0 : i32, i32
  }
  func.func @transform_3(%arg0: i32) -> (i32, i32) {
    %c0_i32 = arith.constant 0 : i32
    %c0_i32_0 = arith.constant 0 : i32
    %c0_i32_1 = arith.constant 0 : i32
    return %c0_i32, %c0_i32_0 : i32, i32
  }
  func.func @transform_4(%arg0: i32) -> (i32, i32) {
    %c0_i32 = arith.constant 0 : i32
    %c0_i32_0 = arith.constant 0 : i32
    %c0_i32_1 = arith.constant 0 : i32
    return %c0_i32, %c0_i32_0 : i32, i32
  }
  func.func @transform_5(%arg0: i32) -> (i32, i32) {
    %c0_i32 = arith.constant 0 : i32
    %c0_i32_0 = arith.constant 0 : i32
    %c0_i32_1 = arith.constant 0 : i32
    return %c0_i32, %c0_i32_0 : i32, i32
  }
  func.func @transform_6(%arg0: i32) -> (i32, i32) {
    %c0_i32 = arith.constant 0 : i32
    %c0_i32_0 = arith.constant 0 : i32
    %c0_i32_1 = arith.constant 0 : i32
    return %c0_i32, %c0_i32_0 : i32, i32
  }
  func.func @transform_7(%arg0: i32) -> (i32, i32) {
    %c0_i32 = arith.constant 0 : i32
    %c0_i32_0 = arith.constant 0 : i32
    %c0_i32_1 = arith.constant 0 : i32
    return %c0_i32, %c0_i32_0 : i32, i32
  }
  func.func @transform_8(%arg0: i32) -> (i32, i32) {
    %c0_i32 = arith.constant 0 : i32
    %c0_i32_0 = arith.constant 0 : i32
    %c0_i32_1 = arith.constant 0 : i32
    return %c0_i32, %c0_i32_0 : i32, i32
  }
  func.func @transform_9(%arg0: i32) -> (i32, i32) {
    %c0_i32 = arith.constant 0 : i32
    %c0_i32_0 = arith.constant 0 : i32
    %c0_i32_1 = arith.constant 0 : i32
    return %c0_i32, %c0_i32_0 : i32, i32
  }
  func.func @transform_10(%arg0: i32) -> (i32, i32, i32) {
    %c0_i32 = arith.constant 0 : i32
    %c0_i32_0 = arith.constant 0 : i32
    %c0_i32_1 = arith.constant 0 : i32
    return %arg0, %c0_i32, %c0_i32_0 : i32, i32, i32
  }
}

</mosaic_0001>

<llo_original>
// kernel: tpu_custom_call.1
$region0: #{tpu_custom_call.1}
  #allocation0 [shape = 'u32[]', space=smem, size = 0x4, offset = 0x4, fixed_abs, tag = 'smem constant byte address 0x4 - core index']
  #allocation1 [shape = 'u32[144,128]{1,0:T(1,128)}', space=vmem, size = 0x12000, scoped, tag = 'internal scratch']
  %s0 = inlined_call_operand.hbm [shape: f32[2,8,32], index: 0, kind: input, shape index: {}]
  %s1 = inlined_call_operand.hbm [shape: f32[32,32], index: 1, kind: input, shape index: {}]
  %s2 = inlined_call_operand.hbm [shape: f32[32,32], index: 2, kind: input, shape index: {}]
  %s3 = inlined_call_operand.hbm [shape: f32[32,32], index: 3, kind: input, shape index: {}]
  %s4 = inlined_call_operand.vmem [shape: f32[1,32], index: 4, kind: input, shape index: {}]
  %s5 = inlined_call_operand.vmem [shape: f32[1,32], index: 5, kind: input, shape index: {}]
  %s6 = inlined_call_operand.hbm [shape: f32[1,32], index: 6, kind: input, shape index: {}]
  %s7 = inlined_call_operand.hbm [shape: f32[32,32], index: 7, kind: input, shape index: {}]
  %s8 = inlined_call_operand.hbm [shape: f32[1,32], index: 8, kind: input, shape index: {}]
  %s9 = inlined_call_operand.vmem [shape: f32[32,32], index: 9, kind: input, shape index: {}]
  %s10 = inlined_call_operand.hbm [shape: f32[2,8,32], index: 10, kind: output, shape index: {}]
  %s11 = sld [smem:[#allocation0]]
  $region78: #{tpu_custom_call.1} parent=0
    _
  %s13 = ssub.s32 1, %s11
  %s14 = scalar_select 0, %s13, %s11
  $region1: #{tpu_custom_call.1} parent=0
    #allocation2 [shape = 'u8[8192]{0}', space=vmem, size = 0x2000, scoped, tag = 'input window, operand 0, single buffered']
    #allocation3 [shape = 's32[1]{0}', space=sflag, size = 0x4, scoped, tag = 'scoped memory for tpu_custom_call.1']
    #allocation4 [shape = 's32[1]{0}', space=sflag, size = 0x4, scoped, tag = 'scoped memory for tpu_custom_call.1']
    #allocation5 [shape = 'u8[16384]{0}', space=vmem, size = 0x4000, scoped, tag = 'input window, operand 1, single buffered']
    #allocation6 [shape = 's32[1]{0}', space=sflag, size = 0x4, scoped, tag = 'scoped memory for tpu_custom_call.1']
    #allocation7 [shape = 'u8[16384]{0}', space=vmem, size = 0x4000, scoped, tag = 'input window, operand 2, single buffered']
    #allocation8 [shape = 'u8[16384]{0}', space=vmem, size = 0x4000, scoped, tag = 'input window, operand 3, single buffered']
    #allocation9 [shape = 's32[1]{0}', space=sflag, size = 0x4, scoped, tag = 'scoped memory for tpu_custom_call.1']
    #allocation10 [shape = 'u8[512]{0}', space=vmem, size = 0x400, scoped, tag = 'input window, operand 6, single buffered']
    #allocation11 [shape = 'u8[16384]{0}', space=vmem, size = 0x4000, scoped, tag = 'input window, operand 7, single buffered']
    #allocation12 [shape = 's32[1]{0}', space=sflag, size = 0x4, scoped, tag = 'scoped memory for tpu_custom_call.1']
    #allocation13 [shape = 'u8[512]{0}', space=vmem, size = 0x400, scoped, tag = 'input window, operand 8, single buffered']
    #allocation14 [shape = 'u8[8192]{0}', space=vmem, size = 0x2000, scoped, tag = 'output window, operand 0, single buffered']
    %15 = vsyncpa [#allocation3], 0
    %16 = vsyncpa [#allocation6], 0
    %17 = vsyncpa [#allocation9], 0
    %18 = vsyncpa [#allocation12], 0
    %19 = vsyncpa [#allocation4], 0
    // Predicated region
    $region2: #{tpu_custom_call.1} parent=1 // pred_check
      _
    $region3: #{tpu_custom_call.1} parent=1 // pred_check_branch
      %21 = sbr.rel (0) target = $region5
    $region4: #{tpu_custom_call.1} parent=1 // pred_region
      %s23 = ssub.s32 256, 256
      %24 = vsyncadd [#allocation3], %s23
      %s25 = sshll.u32 [#allocation2], 4
      %s26 = int_to_ptr.vmem [resolvable:$true] %s25
      %31 = dma.hbm_to_vmem [thread:$0]  %s0, 256, %s26, [#allocation3], 128, 128, 8
    $region5: #{tpu_custom_call.1} parent=1 // pred_fallthru
      _
    // Predicated region
    $region6: #{tpu_custom_call.1} parent=1 // pred_check
      _
    $region7: #{tpu_custom_call.1} parent=1 // pred_check_branch
      %33 = sbr.rel (0) target = $region9
    $region8: #{tpu_custom_call.1} parent=1 // pred_region
      %s35 = ssub.s32 512, 512
      %36 = vsyncadd [#allocation6], %s35
      %s37 = sshll.u32 [#allocation5], 4
      %s38 = int_to_ptr.vmem [resolvable:$true] %s37
      %43 = dma.hbm_to_vmem [thread:$0]  %s1, 512, %s38, [#allocation6], 128, 128, 8
    $region9: #{tpu_custom_call.1} parent=1 // pred_fallthru
      _
    // Predicated region
    $region10: #{tpu_custom_call.1} parent=1 // pred_check
      _
    $region11: #{tpu_custom_call.1} parent=1 // pred_check_branch
      %45 = sbr.rel (0) target = $region13
    $region12: #{tpu_custom_call.1} parent=1 // pred_region
      %s47 = ssub.s32 512, 512
      %48 = vsyncadd [#allocation6], %s47
      %s49 = sshll.u32 [#allocation7], 4
      %s50 = int_to_ptr.vmem [resolvable:$true] %s49
      %55 = dma.hbm_to_vmem [thread:$0]  %s2, 512, %s50, [#allocation6], 128, 128, 8
    $region13: #{tpu_custom_call.1} parent=1 // pred_fallthru
      _
    // Predicated region
    $region14: #{tpu_custom_call.1} parent=1 // pred_check
      _
    $region15: #{tpu_custom_call.1} parent=1 // pred_check_branch
      %57 = sbr.rel (0) target = $region17
    $region16: #{tpu_custom_call.1} parent=1 // pred_region
      %s59 = ssub.s32 512, 512
      %60 = vsyncadd [#allocation9], %s59
      %s61 = sshll.u32 [#allocation8], 4
      %s62 = int_to_ptr.vmem [resolvable:$true] %s61
      %67 = dma.hbm_to_vmem [thread:$0]  %s3, 512, %s62, [#allocation9], 128, 128, 8
    $region17: #{tpu_custom_call.1} parent=1 // pred_fallthru
      _
    // Predicated region
    $region18: #{tpu_custom_call.1} parent=1 // pred_check
      _
    $region19: #{tpu_custom_call.1} parent=1 // pred_check_branch
      %69 = sbr.rel (0) target = $region21
    $region20: #{tpu_custom_call.1} parent=1 // pred_region
      _
    $region21: #{tpu_custom_call.1} parent=1 // pred_fallthru
      _
    // Predicated region
    $region22: #{tpu_custom_call.1} parent=1 // pred_check
      _
    $region23: #{tpu_custom_call.1} parent=1 // pred_check_branch
      %71 = sbr.rel (0) target = $region25
    $region24: #{tpu_custom_call.1} parent=1 // pred_region
      _
    $region25: #{tpu_custom_call.1} parent=1 // pred_fallthru
      _
    // Predicated region
    $region26: #{tpu_custom_call.1} parent=1 // pred_check
      _
    $region27: #{tpu_custom_call.1} parent=1 // pred_check_branch
      %73 = sbr.rel (0) target = $region29
    $region28: #{tpu_custom_call.1} parent=1 // pred_region
      %s75 = ssub.s32 16, 16
      %76 = vsyncadd [#allocation9], %s75
      %s78 = sshll.u32 [#allocation10], 4
      %s79 = int_to_ptr.vmem [resolvable:$true] %s78
      %81 = dma.hbm_to_vmem [thread:$0]  %s6, 16, %s79, [#allocation9]
    $region29: #{tpu_custom_call.1} parent=1 // pred_fallthru
      _
    // Predicated region
    $region30: #{tpu_custom_call.1} parent=1 // pred_check
      _
    $region31: #{tpu_custom_call.1} parent=1 // pred_check_branch
      %83 = sbr.rel (0) target = $region33
    $region32: #{tpu_custom_call.1} parent=1 // pred_region
      %s85 = ssub.s32 512, 512
      %86 = vsyncadd [#allocation12], %s85
      %s87 = sshll.u32 [#allocation11], 4
      %s88 = int_to_ptr.vmem [resolvable:$true] %s87
      %93 = dma.hbm_to_vmem [thread:$0]  %s7, 512, %s88, [#allocation12], 128, 128, 8
    $region33: #{tpu_custom_call.1} parent=1 // pred_fallthru
      _
    // Predicated region
    $region34: #{tpu_custom_call.1} parent=1 // pred_check
      _
    $region35: #{tpu_custom_call.1} parent=1 // pred_check_branch
      %95 = sbr.rel (0) target = $region37
    $region36: #{tpu_custom_call.1} parent=1 // pred_region
      %s97 = ssub.s32 16, 16
      %98 = vsyncadd [#allocation12], %s97
      %s100 = sshll.u32 [#allocation13], 4
      %s101 = int_to_ptr.vmem [resolvable:$true] %s100
      %103 = dma.hbm_to_vmem [thread:$0]  %s8, 16, %s101, [#allocation12]
    $region37: #{tpu_custom_call.1} parent=1 // pred_fallthru
      _
    // Predicated region
    $region38: #{tpu_custom_call.1} parent=1 // pred_check
      _
    $region39: #{tpu_custom_call.1} parent=1 // pred_check_branch
      %105 = sbr.rel (0) target = $region41
    $region40: #{tpu_custom_call.1} parent=1 // pred_region
      _
    $region41: #{tpu_custom_call.1} parent=1 // pred_fallthru
      _
    // Predicated region
    $region42: #{tpu_custom_call.1} parent=1 // pred_check
      _
    $region43: #{tpu_custom_call.1} parent=1 // pred_check_branch
      %107 = sbr.rel (0) target = $region45
    $region44: #{tpu_custom_call.1} parent=1 // pred_region
      %108 = dma.done [#allocation3], 256
    $region45: #{tpu_custom_call.1} parent=1 // pred_fallthru
      _
    // Predicated region
    $region46: #{tpu_custom_call.1} parent=1 // pred_check
      _
    $region47: #{tpu_custom_call.1} parent=1 // pred_check_branch
      %110 = sbr.rel (0) target = $region49
    $region48: #{tpu_custom_call.1} parent=1 // pred_region
      %111 = dma.done [#allocation6], 512
    $region49: #{tpu_custom_call.1} parent=1 // pred_fallthru
      _
    // Predicated region
    $region50: #{tpu_custom_call.1} parent=1 // pred_check
      _
    $region51: #{tpu_custom_call.1} parent=1 // pred_check_branch
      %113 = sbr.rel (0) target = $region53
    $region52: #{tpu_custom_call.1} parent=1 // pred_region
      %114 = dma.done [#allocation6], 512
    $region53: #{tpu_custom_call.1} parent=1 // pred_fallthru
      _
    // Predicated region
    $region54: #{tpu_custom_call.1} parent=1 // pred_check
      _
    $region55: #{tpu_custom_call.1} parent=1 // pred_check_branch
      %116 = sbr.rel (0) target = $region57
    $region56: #{tpu_custom_call.1} parent=1 // pred_region
      %117 = dma.done [#allocation9], 512
    $region57: #{tpu_custom_call.1} parent=1 // pred_fallthru
      _
    // Predicated region
    $region58: #{tpu_custom_call.1} parent=1 // pred_check
      _
    $region59: #{tpu_custom_call.1} parent=1 // pred_check_branch
      %119 = sbr.rel (0) target = $region61
    $region60: #{tpu_custom_call.1} parent=1 // pred_region
      %120 = dma.done [#allocation9], 16
    $region61: #{tpu_custom_call.1} parent=1 // pred_fallthru
      _
    // Predicated region
    $region62: #{tpu_custom_call.1} parent=1 // pred_check
      _
    $region63: #{tpu_custom_call.1} parent=1 // pred_check_branch
      %122 = sbr.rel (0) target = $region65
    $region64: #{tpu_custom_call.1} parent=1 // pred_region
      %123 = dma.done [#allocation12], 512
    $region65: #{tpu_custom_call.1} parent=1 // pred_fallthru
      _
    // Predicated region
    $region66: #{tpu_custom_call.1} parent=1 // pred_check
      _
    $region67: #{tpu_custom_call.1} parent=1 // pred_check_branch
      %125 = sbr.rel (0) target = $region69
    $region68: #{tpu_custom_call.1} parent=1 // pred_region
      %126 = dma.done [#allocation12], 16
    $region69: #{tpu_custom_call.1} parent=1 // pred_fallthru
      _
    %v127 = vld [vmem:[#allocation2] sm:$0xff]
    %v128 = vld [vmem:[#allocation2 + $0x8] sm:$0xff]
    %v129 = vld [vmem:[#allocation5] sm:$0xff]
    %v130 = vld [vmem:[#allocation5 + $0x8] sm:$0xff]
    %v131 = vld [vmem:[#allocation5 + $0x10] sm:$0xff]
    %v132 = vld [vmem:[#allocation5 + $0x18] sm:$0xff]
    %v133 = vld [vmem:[%s4] sm:$0x1]
    %v135 = vlaneseq
    %v136 = vshrl.u32 %v135, 7
    %v137 = vsub.s32 0, %v136
    %v138 = vrot.slane %v133, %v137
    %vm140 = vcmask 261120
    %v142 = vsel %vm140, %v127, 0
    %v145 = vsel %vm140, %v128, 0
    %147 = vmatprep.subr.mxu0 0.0
    %148 = vmatpush1.msra.mxu0 %v129
    %149 = vmatprep.subr.mxu0 0.0
    %150 = vmatpush1.msra.mxu0 %v130
    %151 = vmatprep.subr.mxu0 0.0
    %152 = vmatpush1.msra.mxu0 %v131
    %153 = vmatprep.subr.mxu0 0.0
    %154 = vmatpush1.msra.mxu0 %v132
    %155 = vmatprep.subr.mxu0 0.0
    %156 = vmatpush1.msra.mxu0 0.0
    %157 = vmatprep.subr.mxu0 0.0
    %158 = vmatpush1.msra.mxu0 0.0
    %159 = vmatprep.subr.mxu0 0.0
    %160 = vmatpush1.msra.mxu0 0.0
    %161 = vmatprep.subr.mxu0 0.0
    %162 = vmatpush1.msra.mxu0 0.0
    %163 = vmatprep.subr.mxu0 0.0
    %164 = vmatpush1.msra.mxu0 0.0
    %165 = vmatprep.subr.mxu0 0.0
    %166 = vmatpush1.msra.mxu0 0.0
    %167 = vmatprep.subr.mxu0 0.0
    %168 = vmatpush1.msra.mxu0 0.0
    %169 = vmatprep.subr.mxu0 0.0
    %170 = vmatpush1.msra.mxu0 0.0
    %171 = vmatprep.subr.mxu0 0.0
    %172 = vmatpush1.msra.mxu0 0.0
    %173 = vmatprep.subr.mxu0 0.0
    %174 = vmatpush1.msra.mxu0 0.0
    %175 = vmatprep.subr.mxu0 0.0
    %176 = vmatpush1.msra.mxu0 0.0
    %177 = vmatprep.subr.mxu0 0.0
    %178 = vmatpush1.msra.mxu0 0.0
    %179 = vmatprep.subr.mxu0 0.0
    %180 = vmatpush1.msra.mxu0 0.0
    %181 = vmatprep.subr.mxu0 0.0
    %182 = vmatpush1.msra.mxu0 0.0
    %183 = vmatprep.subr.mxu0 0.0
    %184 = vmatpush1.msra.mxu0 0.0
    %185 = vmatprep.subr.mxu0 0.0
    %186 = vmatpush1.msra.mxu0 0.0
    %187 = vmatprep.subr.mxu0 0.0
    %188 = vmatpush1.msra.mxu0 0.0
    %189 = vmatprep.subr.mxu0 0.0
    %190 = vmatpush1.msra.mxu0 0.0
    %191 = vmatprep.subr.mxu0 0.0
    %192 = vmatpush1.msra.mxu0 0.0
    %193 = vmatprep.subr.mxu0 0.0
    %194 = vmatpush1.msra.mxu0 0.0
    %195 = vmatprep.subr.mxu0 0.0
    %196 = vmatpush1.msra.mxu0 0.0
    %197 = vmatprep.subr.mxu0 0.0
    %198 = vmatpush1.msra.mxu0 0.0
    %199 = vmatprep.subr.mxu0 0.0
    %200 = vmatpush1.msra.mxu0 0.0
    %201 = vmatprep.subr.mxu0 0.0
    %202 = vmatpush1.msra.mxu0 0.0
    %203 = vmatprep.subr.mxu0 0.0
    %204 = vmatpush1.msra.mxu0 0.0
    %205 = vmatprep.subr.mxu0 0.0
    %206 = vmatpush1.msra.mxu0 0.0
    %207 = vmatprep.subr.mxu0 0.0
    %208 = vmatpush1.msra.mxu0 0.0
    %209 = vmatprep.subr.mxu0 0.0
    %210 = vmatpush1.msra.mxu0 0.0
    %211 = vmatprep.mubr.f32.mxu0 0.0
    %212 = vmatmul.mubr.f32.gmra.mrb[0].mxu0 %v142
    %v213 = vpop.f32.mrb[0].mxu0
    %v214 = vadd.f32 %v138, %v213
    %v215 = vpop.f32.mrb[0].mxu0
    %216 = vmatprep.mubr.f32.mxu0 0.0
    %217 = vmatmul.mubr.f32.gmra.mrb[0].mxu0 %v145
    %v218 = vpop.f32.mrb[0].mxu0
    %v219 = vadd.f32 %v138, %v218
    %v220 = vpop.f32.mrb[0].mxu0
    %221 = vdwg.mxu0
    %v222 = vld [vmem:[#allocation7] sm:$0xff]
    %v223 = vld [vmem:[#allocation7 + $0x8] sm:$0xff]
    %v224 = vld [vmem:[#allocation7 + $0x10] sm:$0xff]
    %v225 = vld [vmem:[#allocation7 + $0x18] sm:$0xff]
    %v226 = vld [vmem:[%s5] sm:$0x1]
    %v228 = vlaneseq
    %v229 = vshrl.u32 %v228, 7
    %v230 = vsub.s32 0, %v229
    %v231 = vrot.slane %v226, %v230
    %233 = vmatprep.subr.mxu0 0.0
    %234 = vmatpush1.msra.mxu0 %v222
    %235 = vmatprep.subr.mxu0 0.0
    %236 = vmatpush1.msra.mxu0 %v223
    %237 = vmatprep.subr.mxu0 0.0
    %238 = vmatpush1.msra.mxu0 %v224
    %239 = vmatprep.subr.mxu0 0.0
    %240 = vmatpush1.msra.mxu0 %v225
    %241 = vmatprep.subr.mxu0 0.0
    %242 = vmatpush1.msra.mxu0 0.0
    %243 = vmatprep.subr.mxu0 0.0
    %244 = vmatpush1.msra.mxu0 0.0
    %245 = vmatprep.subr.mxu0 0.0
    %246 = vmatpush1.msra.mxu0 0.0
    %247 = vmatprep.subr.mxu0 0.0
    %248 = vmatpush1.msra.mxu0 0.0
    %249 = vmatprep.subr.mxu0 0.0
    %250 = vmatpush1.msra.mxu0 0.0
    %251 = vmatprep.subr.mxu0 0.0
    %252 = vmatpush1.msra.mxu0 0.0
    %253 = vmatprep.subr.mxu0 0.0
    %254 = vmatpush1.msra.mxu0 0.0
    %255 = vmatprep.subr.mxu0 0.0
    %256 = vmatpush1.msra.mxu0 0.0
    %257 = vmatprep.subr.mxu0 0.0
    %258 = vmatpush1.msra.mxu0 0.0
    %259 = vmatprep.subr.mxu0 0.0
    %260 = vmatpush1.msra.mxu0 0.0
    %261 = vmatprep.subr.mxu0 0.0
    %262 = vmatpush1.msra.mxu0 0.0
    %263 = vmatprep.subr.mxu0 0.0
    %264 = vmatpush1.msra.mxu0 0.0
    %265 = vmatprep.subr.mxu0 0.0
    %266 = vmatpush1.msra.mxu0 0.0
    %267 = vmatprep.subr.mxu0 0.0
    %268 = vmatpush1.msra.mxu0 0.0
    %269 = vmatprep.subr.mxu0 0.0
    %270 = vmatpush1.msra.mxu0 0.0
    %271 = vmatprep.subr.mxu0 0.0
    %272 = vmatpush1.msra.mxu0 0.0
    %273 = vmatprep.subr.mxu0 0.0
    %274 = vmatpush1.msra.mxu0 0.0
    %275 = vmatprep.subr.mxu0 0.0
    %276 = vmatpush1.msra.mxu0 0.0
    %277 = vmatprep.subr.mxu0 0.0
    %278 = vmatpush1.msra.mxu0 0.0
    %279 = vmatprep.subr.mxu0 0.0
    %280 = vmatpush1.msra.mxu0 0.0
    %281 = vmatprep.subr.mxu0 0.0
    %282 = vmatpush1.msra.mxu0 0.0
    %283 = vmatprep.subr.mxu0 0.0
    %284 = vmatpush1.msra.mxu0 0.0
    %285 = vmatprep.subr.mxu0 0.0
    %286 = vmatpush1.msra.mxu0 0.0
    %287 = vmatprep.subr.mxu0 0.0
    %288 = vmatpush1.msra.mxu0 0.0
    %289 = vmatprep.subr.mxu0 0.0
    %290 = vmatpush1.msra.mxu0 0.0
    %291 = vmatprep.subr.mxu0 0.0
    %292 = vmatpush1.msra.mxu0 0.0
    %293 = vmatprep.subr.mxu0 0.0
    %294 = vmatpush1.msra.mxu0 0.0
    %295 = vmatprep.subr.mxu0 0.0
    %296 = vmatpush1.msra.mxu0 0.0
    %297 = vmatprep.mubr.f32.mxu0 0.0
    %298 = vmatmul.mubr.f32.gmra.mrb[0].mxu0 %v142
    %v299 = vpop.f32.mrb[0].mxu0
    %v300 = vadd.f32 %v231, %v299
    %v301 = vpop.f32.mrb[0].mxu0
    %302 = vmatprep.mubr.f32.mxu0 0.0
    %303 = vmatmul.mubr.f32.gmra.mrb[0].mxu0 %v145
    %v304 = vpop.f32.mrb[0].mxu0
    %v305 = vadd.f32 %v231, %v304
    %v306 = vpop.f32.mrb[0].mxu0
    %307 = vdwg.mxu0
    %v308 = vld [vmem:[#allocation8] sm:$0xff]
    %v309 = vld [vmem:[#allocation8 + $0x8] sm:$0xff]
    %v310 = vld [vmem:[#allocation8 + $0x10] sm:$0xff]
    %v311 = vld [vmem:[#allocation8 + $0x18] sm:$0xff]
    %v312 = vld [vmem:[#allocation10] sm:$0x1]
    %v314 = vlaneseq
    %v315 = vshrl.u32 %v314, 7
    %v316 = vsub.s32 0, %v315
    %v317 = vrot.slane %v312, %v316
    %319 = vmatprep.subr.mxu0 0.0
    %320 = vmatpush1.msra.mxu0 %v308
    %321 = vmatprep.subr.mxu0 0.0
    %322 = vmatpush1.msra.mxu0 %v309
    %323 = vmatprep.subr.mxu0 0.0
    %324 = vmatpush1.msra.mxu0 %v310
    %325 = vmatprep.subr.mxu0 0.0
    %326 = vmatpush1.msra.mxu0 %v311
    %327 = vmatprep.subr.mxu0 0.0
    %328 = vmatpush1.msra.mxu0 0.0
    %329 = vmatprep.subr.mxu0 0.0
    %330 = vmatpush1.msra.mxu0 0.0
    %331 = vmatprep.subr.mxu0 0.0
    %332 = vmatpush1.msra.mxu0 0.0
    %333 = vmatprep.subr.mxu0 0.0
    %334 = vmatpush1.msra.mxu0 0.0
    %335 = vmatprep.subr.mxu0 0.0
    %336 = vmatpush1.msra.mxu0 0.0
    %337 = vmatprep.subr.mxu0 0.0
    %338 = vmatpush1.msra.mxu0 0.0
    %339 = vmatprep.subr.mxu0 0.0
    %340 = vmatpush1.msra.mxu0 0.0
    %341 = vmatprep.subr.mxu0 0.0
    %342 = vmatpush1.msra.mxu0 0.0
    %343 = vmatprep.subr.mxu0 0.0
    %344 = vmatpush1.msra.mxu0 0.0
    %345 = vmatprep.subr.mxu0 0.0
    %346 = vmatpush1.msra.mxu0 0.0
    %347 = vmatprep.subr.mxu0 0.0
    %348 = vmatpush1.msra.mxu0 0.0
    %349 = vmatprep.subr.mxu0 0.0
    %350 = vmatpush1.msra.mxu0 0.0
    %351 = vmatprep.subr.mxu0 0.0
    %352 = vmatpush1.msra.mxu0 0.0
    %353 = vmatprep.subr.mxu0 0.0
    %354 = vmatpush1.msra.mxu0 0.0
    %355 = vmatprep.subr.mxu0 0.0
    %356 = vmatpush1.msra.mxu0 0.0
    %357 = vmatprep.subr.mxu0 0.0
    %358 = vmatpush1.msra.mxu0 0.0
    %359 = vmatprep.subr.mxu0 0.0
    %360 = vmatpush1.msra.mxu0 0.0
    %361 = vmatprep.subr.mxu0 0.0
    %362 = vmatpush1.msra.mxu0 0.0
    %363 = vmatprep.subr.mxu0 0.0
    %364 = vmatpush1.msra.mxu0 0.0
    %365 = vmatprep.subr.mxu0 0.0
    %366 = vmatpush1.msra.mxu0 0.0
    %367 = vmatprep.subr.mxu0 0.0
    %368 = vmatpush1.msra.mxu0 0.0
    %369 = vmatprep.subr.mxu0 0.0
    %370 = vmatpush1.msra.mxu0 0.0
    %371 = vmatprep.subr.mxu0 0.0
    %372 = vmatpush1.msra.mxu0 0.0
    %373 = vmatprep.subr.mxu0 0.0
    %374 = vmatpush1.msra.mxu0 0.0
    %375 = vmatprep.subr.mxu0 0.0
    %376 = vmatpush1.msra.mxu0 0.0
    %377 = vmatprep.subr.mxu0 0.0
    %378 = vmatpush1.msra.mxu0 0.0
    %379 = vmatprep.subr.mxu0 0.0
    %380 = vmatpush1.msra.mxu0 0.0
    %381 = vmatprep.subr.mxu0 0.0
    %382 = vmatpush1.msra.mxu0 0.0
    %383 = vmatprep.mubr.f32.mxu0 0.0
    %384 = vmatmul.mubr.f32.gmra.mrb[0].mxu0 %v142
    %v385 = vpop.f32.mrb[0].mxu0
    %v386 = vadd.f32 %v317, %v385
    %v387 = vpop.f32.mrb[0].mxu0
    %388 = vmatprep.mubr.f32.mxu0 0.0
    %389 = vmatmul.mubr.f32.gmra.mrb[0].mxu0 %v145
    %v390 = vpop.f32.mrb[0].mxu0
    %v391 = vadd.f32 %v317, %v390
    %v392 = vpop.f32.mrb[0].mxu0
    %393 = vdwg.mxu0
    %v394 = vmul.f32 %v214, 0.35355338
    %v395 = vmul.f32 %v219, 0.35355338
    %v396 = vlaneseq
    %v397 = vand.u32 %v396, 127
    %vm398 = vcmp.ge.s32.totalorder %v397, 0
    %vm399 = vcmp.lt.s32.totalorder %v397, 8
    %vm400 = vmand %vm398, %vm399
    %v401 = vsel %vm400, 1.0, 0.0
    %v402 = vmul.f32 %v394, %v401
    %v403 = vmul.f32 %v395, %v401
    %v405 = vsel %vm140, %v402, 0
    %v408 = vsel %vm140, %v300, 0
    %410 = vmatprep.subr.mxu0 0.0
    %411 = vmatpush1.xpose.msra.mxu0 %v408
    %412 = vmatprep.subr.mxu0 0.0
    %413 = vmatpush1.xpose.msra.mxu0 0.0
    %414 = vmatprep.subr.mxu0 0.0
    %415 = vmatpush1.xpose.msra.mxu0 0.0
    %416 = vmatprep.subr.mxu0 0.0
    %417 = vmatpush1.xpose.msra.mxu0 0.0
    %418 = vmatprep.subr.mxu0 0.0
    %419 = vmatpush1.xpose.msra.mxu0 0.0
    %420 = vmatprep.subr.mxu0 0.0
    %421 = vmatpush1.xpose.msra.mxu0 0.0
    %422 = vmatprep.subr.mxu0 0.0
    %423 = vmatpush1.xpose.msra.mxu0 0.0
    %424 = vmatprep.subr.mxu0 0.0
    %425 = vmatpush1.xpose.msra.mxu0 0.0
    %426 = vmatprep.subr.mxu0 0.0
    %427 = vmatpush1.xpose.msra.mxu0 0.0
    %428 = vmatprep.subr.mxu0 0.0
    %429 = vmatpush1.xpose.msra.mxu0 0.0
    %430 = vmatprep.subr.mxu0 0.0
    %431 = vmatpush1.xpose.msra.mxu0 0.0
    %432 = vmatprep.subr.mxu0 0.0
    %433 = vmatpush1.xpose.msra.mxu0 0.0
    %434 = vmatprep.subr.mxu0 0.0
    %435 = vmatpush1.xpose.msra.mxu0 0.0
    %436 = vmatprep.subr.mxu0 0.0
    %437 = vmatpush1.xpose.msra.mxu0 0.0
    %438 = vmatprep.subr.mxu0 0.0
    %439 = vmatpush1.xpose.msra.mxu0 0.0
    %440 = vmatprep.subr.mxu0 0.0
    %441 = vmatpush1.xpose.msra.mxu0 0.0
    %442 = vmatprep.subr.mxu0 0.0
    %443 = vmatpush1.xpose.msra.mxu0 0.0
    %444 = vmatprep.subr.mxu0 0.0
    %445 = vmatpush1.xpose.msra.mxu0 0.0
    %446 = vmatprep.subr.mxu0 0.0
    %447 = vmatpush1.xpose.msra.mxu0 0.0
    %448 = vmatprep.subr.mxu0 0.0
    %449 = vmatpush1.xpose.msra.mxu0 0.0
    %450 = vmatprep.subr.mxu0 0.0
    %451 = vmatpush1.xpose.msra.mxu0 0.0
    %452 = vmatprep.subr.mxu0 0.0
    %453 = vmatpush1.xpose.msra.mxu0 0.0
    %454 = vmatprep.subr.mxu0 0.0
    %455 = vmatpush1.xpose.msra.mxu0 0.0
    %456 = vmatprep.subr.mxu0 0.0
    %457 = vmatpush1.xpose.msra.mxu0 0.0
    %458 = vmatprep.subr.mxu0 0.0
    %459 = vmatpush1.xpose.msra.mxu0 0.0
    %460 = vmatprep.subr.mxu0 0.0
    %461 = vmatpush1.xpose.msra.mxu0 0.0
    %462 = vmatprep.subr.mxu0 0.0
    %463 = vmatpush1.xpose.msra.mxu0 0.0
    %464 = vmatprep.subr.mxu0 0.0
    %465 = vmatpush1.xpose.msra.mxu0 0.0
    %466 = vmatprep.subr.mxu0 0.0
    %467 = vmatpush1.xpose.msra.mxu0 0.0
    %468 = vmatprep.subr.mxu0 0.0
    %469 = vmatpush1.xpose.msra.mxu0 0.0
    %470 = vmatprep.subr.mxu0 0.0
    %471 = vmatpush1.xpose.msra.mxu0 0.0
    %472 = vmatprep.subr.mxu0 0.0
    %473 = vmatpush1.xpose.msra.mxu0 0.0
    %474 = vmatprep.mubr.f32.mxu0 0.0
    %475 = vmatmul.mubr.f32.gmra.mrb[0].mxu0 %v405
    %v476 = vpop.f32.mrb[0].mxu0
    %v477 = vadd.f32 0.0, %v476
    %v478 = vpop.f32.mrb[0].mxu0
    %479 = vdwg.mxu0
    %v481 = vsel %vm140, %v403, 0
    %v484 = vsel %vm140, %v305, 0
    %486 = vmatprep.subr.mxu0 0.0
    %487 = vmatpush1.xpose.msra.mxu0 %v484
    %488 = vmatprep.subr.mxu0 0.0
    %489 = vmatpush1.xpose.msra.mxu0 0.0
    %490 = vmatprep.subr.mxu0 0.0
    %491 = vmatpush1.xpose.msra.mxu0 0.0
    %492 = vmatprep.subr.mxu0 0.0
    %493 = vmatpush1.xpose.msra.mxu0 0.0
    %494 = vmatprep.subr.mxu0 0.0
    %495 = vmatpush1.xpose.msra.mxu0 0.0
    %496 = vmatprep.subr.mxu0 0.0
    %497 = vmatpush1.xpose.msra.mxu0 0.0
    %498 = vmatprep.subr.mxu0 0.0
    %499 = vmatpush1.xpose.msra.mxu0 0.0
    %500 = vmatprep.subr.mxu0 0.0
    %501 = vmatpush1.xpose.msra.mxu0 0.0
    %502 = vmatprep.subr.mxu0 0.0
    %503 = vmatpush1.xpose.msra.mxu0 0.0
    %504 = vmatprep.subr.mxu0 0.0
    %505 = vmatpush1.xpose.msra.mxu0 0.0
    %506 = vmatprep.subr.mxu0 0.0
    %507 = vmatpush1.xpose.msra.mxu0 0.0
    %508 = vmatprep.subr.mxu0 0.0
    %509 = vmatpush1.xpose.msra.mxu0 0.0
    %510 = vmatprep.subr.mxu0 0.0
    %511 = vmatpush1.xpose.msra.mxu0 0.0
    %512 = vmatprep.subr.mxu0 0.0
    %513 = vmatpush1.xpose.msra.mxu0 0.0
    %514 = vmatprep.subr.mxu0 0.0
    %515 = vmatpush1.xpose.msra.mxu0 0.0
    %516 = vmatprep.subr.mxu0 0.0
    %517 = vmatpush1.xpose.msra.mxu0 0.0
    %518 = vmatprep.subr.mxu0 0.0
    %519 = vmatpush1.xpose.msra.mxu0 0.0
    %520 = vmatprep.subr.mxu0 0.0
    %521 = vmatpush1.xpose.msra.mxu0 0.0
    %522 = vmatprep.subr.mxu0 0.0
    %523 = vmatpush1.xpose.msra.mxu0 0.0
    %524 = vmatprep.subr.mxu0 0.0
    %525 = vmatpush1.xpose.msra.mxu0 0.0
    %526 = vmatprep.subr.mxu0 0.0
    %527 = vmatpush1.xpose.msra.mxu0 0.0
    %528 = vmatprep.subr.mxu0 0.0
    %529 = vmatpush1.xpose.msra.mxu0 0.0
    %530 = vmatprep.subr.mxu0 0.0
    %531 = vmatpush1.xpose.msra.mxu0 0.0
    %532 = vmatprep.subr.mxu0 0.0
    %533 = vmatpush1.xpose.msra.mxu0 0.0
    %534 = vmatprep.subr.mxu0 0.0
    %535 = vmatpush1.xpose.msra.mxu0 0.0
    %536 = vmatprep.subr.mxu0 0.0
    %537 = vmatpush1.xpose.msra.mxu0 0.0
    %538 = vmatprep.subr.mxu0 0.0
    %539 = vmatpush1.xpose.msra.mxu0 0.0
    %540 = vmatprep.subr.mxu0 0.0
    %541 = vmatpush1.xpose.msra.mxu0 0.0
    %542 = vmatprep.subr.mxu0 0.0
    %543 = vmatpush1.xpose.msra.mxu0 0.0
    %544 = vmatprep.subr.mxu0 0.0
    %545 = vmatpush1.xpose.msra.mxu0 0.0
    %546 = vmatprep.subr.mxu0 0.0
    %547 = vmatpush1.xpose.msra.mxu0 0.0
    %548 = vmatprep.subr.mxu0 0.0
    %549 = vmatpush1.xpose.msra.mxu0 0.0
    %550 = vmatprep.mubr.f32.mxu0 0.0
    %551 = vmatmul.mubr.f32.gmra.mrb[0].mxu0 %v481
    %v552 = vpop.f32.mrb[0].mxu0
    %v553 = vadd.f32 0.0, %v552
    %v554 = vpop.f32.mrb[0].mxu0
    %555 = vdwg.mxu0
    %vm556 = vcmask 64512
    %v557 = vsel %vm556, %v477, -inf
    %558 = vmax.xlane.f32.xlu0 %v557
    %v559 = vpop.xlane.xlu0 %558
    %v560 = vsel %vm556, %v553, -inf
    %561 = vmax.xlane.f32.xlu0 %v560
    %v562 = vpop.xlane.xlu0 %561
    %v563 = vsub.f32 %v477, %v559
    %v564 = vsub.f32 %v553, %v562
    %v565 = vmul.f32 %v563, 1.442695
    %v566 = vpow.pop %v565
    %v567 = vmul.f32 %v564, 1.442695
    %v568 = vpow.pop %v567
    %v569 = vsel %vm556, %v566, 0.0
    %570 = vadd.xlane.f32.xlu0 %v569
    %v571 = vpop.xlane.xlu0 %570
    %v572 = vsel %vm556, %v568, 0.0
    %573 = vadd.xlane.f32.xlu0 %v572
    %v574 = vpop.xlane.xlu0 %573
    %v575 = vrcp.pop %v571
    %v576 = vrcp.pop %v574
    %v577 = vmul.f32 %v566, %v575
    %v578 = vmul.f32 %v568, %v576
    %v580 = vsel %vm556, %v577, 0
    %582 = vmatprep.subr.mxu0 0.0
    %583 = vmatpush1.msra.mxu0 %v386
    %584 = vmatprep.subr.mxu0 0.0
    %585 = vmatpush1.msra.mxu0 0.0
    %586 = vmatprep.subr.mxu0 0.0
    %587 = vmatpush1.msra.mxu0 0.0
    %588 = vmatprep.subr.mxu0 0.0
    %589 = vmatpush1.msra.mxu0 0.0
    %590 = vmatprep.subr.mxu0 0.0
    %591 = vmatpush1.msra.mxu0 0.0
    %592 = vmatprep.subr.mxu0 0.0
    %593 = vmatpush1.msra.mxu0 0.0
    %594 = vmatprep.subr.mxu0 0.0
    %595 = vmatpush1.msra.mxu0 0.0
    %596 = vmatprep.subr.mxu0 0.0
    %597 = vmatpush1.msra.mxu0 0.0
    %598 = vmatprep.subr.mxu0 0.0
    %599 = vmatpush1.msra.mxu0 0.0
    %600 = vmatprep.subr.mxu0 0.0
    %601 = vmatpush1.msra.mxu0 0.0
    %602 = vmatprep.subr.mxu0 0.0
    %603 = vmatpush1.msra.mxu0 0.0
    %604 = vmatprep.subr.mxu0 0.0
    %605 = vmatpush1.msra.mxu0 0.0
    %606 = vmatprep.subr.mxu0 0.0
    %607 = vmatpush1.msra.mxu0 0.0
    %608 = vmatprep.subr.mxu0 0.0
    %609 = vmatpush1.msra.mxu0 0.0
    %610 = vmatprep.subr.mxu0 0.0
    %611 = vmatpush1.msra.mxu0 0.0
    %612 = vmatprep.subr.mxu0 0.0
    %613 = vmatpush1.msra.mxu0 0.0
    %614 = vmatprep.subr.mxu0 0.0
    %615 = vmatpush1.msra.mxu0 0.0
    %616 = vmatprep.subr.mxu0 0.0
    %617 = vmatpush1.msra.mxu0 0.0
    %618 = vmatprep.subr.mxu0 0.0
    %619 = vmatpush1.msra.mxu0 0.0
    %620 = vmatprep.subr.mxu0 0.0
    %621 = vmatpush1.msra.mxu0 0.0
    %622 = vmatprep.subr.mxu0 0.0
    %623 = vmatpush1.msra.mxu0 0.0
    %624 = vmatprep.subr.mxu0 0.0
    %625 = vmatpush1.msra.mxu0 0.0
    %626 = vmatprep.subr.mxu0 0.0
    %627 = vmatpush1.msra.mxu0 0.0
    %628 = vmatprep.subr.mxu0 0.0
    %629 = vmatpush1.msra.mxu0 0.0
    %630 = vmatprep.subr.mxu0 0.0
    %631 = vmatpush1.msra.mxu0 0.0
    %632 = vmatprep.subr.mxu0 0.0
    %633 = vmatpush1.msra.mxu0 0.0
    %634 = vmatprep.subr.mxu0 0.0
    %635 = vmatpush1.msra.mxu0 0.0
    %636 = vmatprep.subr.mxu0 0.0
    %637 = vmatpush1.msra.mxu0 0.0
    %638 = vmatprep.subr.mxu0 0.0
    %639 = vmatpush1.msra.mxu0 0.0
    %640 = vmatprep.subr.mxu0 0.0
    %641 = vmatpush1.msra.mxu0 0.0
    %642 = vmatprep.subr.mxu0 0.0
    %643 = vmatpush1.msra.mxu0 0.0
    %644 = vmatprep.subr.mxu0 0.0
    %645 = vmatpush1.msra.mxu0 0.0
    %646 = vmatprep.mubr.f32.mxu0 0.0
    %647 = vmatmul.mubr.f32.gmra.mrb[0].mxu0 %v580
    %v648 = vpop.f32.mrb[0].mxu0
    %v649 = vadd.f32 0.0, %v648
    %v650 = vpop.f32.mrb[0].mxu0
    %651 = vdwg.mxu0
    %v653 = vsel %vm556, %v578, 0
    %655 = vmatprep.subr.mxu0 0.0
    %656 = vmatpush1.msra.mxu0 %v391
    %657 = vmatprep.subr.mxu0 0.0
    %658 = vmatpush1.msra.mxu0 0.0
    %659 = vmatprep.subr.mxu0 0.0
    %660 = vmatpush1.msra.mxu0 0.0
    %661 = vmatprep.subr.mxu0 0.0
    %662 = vmatpush1.msra.mxu0 0.0
    %663 = vmatprep.subr.mxu0 0.0
    %664 = vmatpush1.msra.mxu0 0.0
    %665 = vmatprep.subr.mxu0 0.0
    %666 = vmatpush1.msra.mxu0 0.0
    %667 = vmatprep.subr.mxu0 0.0
    %668 = vmatpush1.msra.mxu0 0.0
    %669 = vmatprep.subr.mxu0 0.0
    %670 = vmatpush1.msra.mxu0 0.0
    %671 = vmatprep.subr.mxu0 0.0
    %672 = vmatpush1.msra.mxu0 0.0
    %673 = vmatprep.subr.mxu0 0.0
    %674 = vmatpush1.msra.mxu0 0.0
    %675 = vmatprep.subr.mxu0 0.0
    %676 = vmatpush1.msra.mxu0 0.0
    %677 = vmatprep.subr.mxu0 0.0
    %678 = vmatpush1.msra.mxu0 0.0
    %679 = vmatprep.subr.mxu0 0.0
    %680 = vmatpush1.msra.mxu0 0.0
    %681 = vmatprep.subr.mxu0 0.0
    %682 = vmatpush1.msra.mxu0 0.0
    %683 = vmatprep.subr.mxu0 0.0
    %684 = vmatpush1.msra.mxu0 0.0
    %685 = vmatprep.subr.mxu0 0.0
    %686 = vmatpush1.msra.mxu0 0.0
    %687 = vmatprep.subr.mxu0 0.0
    %688 = vmatpush1.msra.mxu0 0.0
    %689 = vmatprep.subr.mxu0 0.0
    %690 = vmatpush1.msra.mxu0 0.0
    %691 = vmatprep.subr.mxu0 0.0
    %692 = vmatpush1.msra.mxu0 0.0
    %693 = vmatprep.subr.mxu0 0.0
    %694 = vmatpush1.msra.mxu0 0.0
    %695 = vmatprep.subr.mxu0 0.0
    %696 = vmatpush1.msra.mxu0 0.0
    %697 = vmatprep.subr.mxu0 0.0
    %698 = vmatpush1.msra.mxu0 0.0
    %699 = vmatprep.subr.mxu0 0.0
    %700 = vmatpush1.msra.mxu0 0.0
    %701 = vmatprep.subr.mxu0 0.0
    %702 = vmatpush1.msra.mxu0 0.0
    %703 = vmatprep.subr.mxu0 0.0
    %704 = vmatpush1.msra.mxu0 0.0
    %705 = vmatprep.subr.mxu0 0.0
    %706 = vmatpush1.msra.mxu0 0.0
    %707 = vmatprep.subr.mxu0 0.0
    %708 = vmatpush1.msra.mxu0 0.0
    %709 = vmatprep.subr.mxu0 0.0
    %710 = vmatpush1.msra.mxu0 0.0
    %711 = vmatprep.subr.mxu0 0.0
    %712 = vmatpush1.msra.mxu0 0.0
    %713 = vmatprep.subr.mxu0 0.0
    %714 = vmatpush1.msra.mxu0 0.0
    %715 = vmatprep.subr.mxu0 0.0
    %716 = vmatpush1.msra.mxu0 0.0
    %717 = vmatprep.subr.mxu0 0.0
    %718 = vmatpush1.msra.mxu0 0.0
    %719 = vmatprep.mubr.f32.mxu0 0.0
    %720 = vmatmul.mubr.f32.gmra.mrb[0].mxu0 %v653
    %v721 = vpop.f32.mrb[0].mxu0
    %v722 = vadd.f32 0.0, %v721
    %v723 = vpop.f32.mrb[0].mxu0
    %724 = vdwg.mxu0
    %v725 = vmul.f32 %v649, %v401
    %v726 = vmul.f32 %v722, %v401
    %v727 = vadd.f32 %v725, 0.0
    %v728 = vadd.f32 %v726, 0.0
    %vm729 = vcmp.ge.s32.totalorder %v397, 8
    %vm730 = vcmp.lt.s32.totalorder %v397, 16
    %vm731 = vmand %vm729, %vm730
    %v732 = vsel %vm731, 1.0, 0.0
    %v733 = vmul.f32 %v394, %v732
    %v734 = vmul.f32 %v395, %v732
    %v736 = vsel %vm140, %v733, 0
    %738 = vmatprep.subr.mxu0 0.0
    %739 = vmatpush1.xpose.msra.mxu0 %v408
    %740 = vmatprep.subr.mxu0 0.0
    %741 = vmatpush1.xpose.msra.mxu0 0.0
    %742 = vmatprep.subr.mxu0 0.0
    %743 = vmatpush1.xpose.msra.mxu0 0.0
    %744 = vmatprep.subr.mxu0 0.0
    %745 = vmatpush1.xpose.msra.mxu0 0.0
    %746 = vmatprep.subr.mxu0 0.0
    %747 = vmatpush1.xpose.msra.mxu0 0.0
    %748 = vmatprep.subr.mxu0 0.0
    %749 = vmatpush1.xpose.msra.mxu0 0.0
    %750 = vmatprep.subr.mxu0 0.0
    %751 = vmatpush1.xpose.msra.mxu0 0.0
    %752 = vmatprep.subr.mxu0 0.0
    %753 = vmatpush1.xpose.msra.mxu0 0.0
    %754 = vmatprep.subr.mxu0 0.0
    %755 = vmatpush1.xpose.msra.mxu0 0.0
    %756 = vmatprep.subr.mxu0 0.0
    %757 = vmatpush1.xpose.msra.mxu0 0.0
    %758 = vmatprep.subr.mxu0 0.0
    %759 = vmatpush1.xpose.msra.mxu0 0.0
    %760 = vmatprep.subr.mxu0 0.0
    %761 = vmatpush1.xpose.msra.mxu0 0.0
    %762 = vmatprep.subr.mxu0 0.0
    %763 = vmatpush1.xpose.msra.mxu0 0.0
    %764 = vmatprep.subr.mxu0 0.0
    %765 = vmatpush1.xpose.msra.mxu0 0.0
    %766 = vmatprep.subr.mxu0 0.0
    %767 = vmatpush1.xpose.msra.mxu0 0.0
    %768 = vmatprep.subr.mxu0 0.0
    %769 = vmatpush1.xpose.msra.mxu0 0.0
    %770 = vmatprep.subr.mxu0 0.0
    %771 = vmatpush1.xpose.msra.mxu0 0.0
    %772 = vmatprep.subr.mxu0 0.0
    %773 = vmatpush1.xpose.msra.mxu0 0.0
    %774 = vmatprep.subr.mxu0 0.0
    %775 = vmatpush1.xpose.msra.mxu0 0.0
    %776 = vmatprep.subr.mxu0 0.0
    %777 = vmatpush1.xpose.msra.mxu0 0.0
    %778 = vmatprep.subr.mxu0 0.0
    %779 = vmatpush1.xpose.msra.mxu0 0.0
    %780 = vmatprep.subr.mxu0 0.0
    %781 = vmatpush1.xpose.msra.mxu0 0.0
    %782 = vmatprep.subr.mxu0 0.0
    %783 = vmatpush1.xpose.msra.mxu0 0.0
    %784 = vmatprep.subr.mxu0 0.0
    %785 = vmatpush1.xpose.msra.mxu0 0.0
    %786 = vmatprep.subr.mxu0 0.0
    %787 = vmatpush1.xpose.msra.mxu0 0.0
    %788 = vmatprep.subr.mxu0 0.0
    %789 = vmatpush1.xpose.msra.mxu0 0.0
    %790 = vmatprep.subr.mxu0 0.0
    %791 = vmatpush1.xpose.msra.mxu0 0.0
    %792 = vmatprep.subr.mxu0 0.0
    %793 = vmatpush1.xpose.msra.mxu0 0.0
    %794 = vmatprep.subr.mxu0 0.0
    %795 = vmatpush1.xpose.msra.mxu0 0.0
    %796 = vmatprep.subr.mxu0 0.0
    %797 = vmatpush1.xpose.msra.mxu0 0.0
    %798 = vmatprep.subr.mxu0 0.0
    %799 = vmatpush1.xpose.msra.mxu0 0.0
    %800 = vmatprep.subr.mxu0 0.0
    %801 = vmatpush1.xpose.msra.mxu0 0.0
    %802 = vmatprep.mubr.f32.mxu0 0.0
    %803 = vmatmul.mubr.f32.gmra.mrb[0].mxu0 %v736
    %v804 = vpop.f32.mrb[0].mxu0
    %v805 = vadd.f32 0.0, %v804
    %v806 = vpop.f32.mrb[0].mxu0
    %807 = vdwg.mxu0
    %v809 = vsel %vm140, %v734, 0
    %811 = vmatprep.subr.mxu0 0.0
    %812 = vmatpush1.xpose.msra.mxu0 %v484
    %813 = vmatprep.subr.mxu0 0.0
    %814 = vmatpush1.xpose.msra.mxu0 0.0
    %815 = vmatprep.subr.mxu0 0.0
    %816 = vmatpush1.xpose.msra.mxu0 0.0
    %817 = vmatprep.subr.mxu0 0.0
    %818 = vmatpush1.xpose.msra.mxu0 0.0
    %819 = vmatprep.subr.mxu0 0.0
    %820 = vmatpush1.xpose.msra.mxu0 0.0
    %821 = vmatprep.subr.mxu0 0.0
    %822 = vmatpush1.xpose.msra.mxu0 0.0
    %823 = vmatprep.subr.mxu0 0.0
    %824 = vmatpush1.xpose.msra.mxu0 0.0
    %825 = vmatprep.subr.mxu0 0.0
    %826 = vmatpush1.xpose.msra.mxu0 0.0
    %827 = vmatprep.subr.mxu0 0.0
    %828 = vmatpush1.xpose.msra.mxu0 0.0
    %829 = vmatprep.subr.mxu0 0.0
    %830 = vmatpush1.xpose.msra.mxu0 0.0
    %831 = vmatprep.subr.mxu0 0.0
    %832 = vmatpush1.xpose.msra.mxu0 0.0
    %833 = vmatprep.subr.mxu0 0.0
    %834 = vmatpush1.xpose.msra.mxu0 0.0
    %835 = vmatprep.subr.mxu0 0.0
    %836 = vmatpush1.xpose.msra.mxu0 0.0
    %837 = vmatprep.subr.mxu0 0.0
    %838 = vmatpush1.xpose.msra.mxu0 0.0
    %839 = vmatprep.subr.mxu0 0.0
    %840 = vmatpush1.xpose.msra.mxu0 0.0
    %841 = vmatprep.subr.mxu0 0.0
    %842 = vmatpush1.xpose.msra.mxu0 0.0
    %843 = vmatprep.subr.mxu0 0.0
    %844 = vmatpush1.xpose.msra.mxu0 0.0
    %845 = vmatprep.subr.mxu0 0.0
    %846 = vmatpush1.xpose.msra.mxu0 0.0
    %847 = vmatprep.subr.mxu0 0.0
    %848 = vmatpush1.xpose.msra.mxu0 0.0
    %849 = vmatprep.subr.mxu0 0.0
    %850 = vmatpush1.xpose.msra.mxu0 0.0
    %851 = vmatprep.subr.mxu0 0.0
    %852 = vmatpush1.xpose.msra.mxu0 0.0
    %853 = vmatprep.subr.mxu0 0.0
    %854 = vmatpush1.xpose.msra.mxu0 0.0
    %855 = vmatprep.subr.mxu0 0.0
    %856 = vmatpush1.xpose.msra.mxu0 0.0
    %857 = vmatprep.subr.mxu0 0.0
    %858 = vmatpush1.xpose.msra.mxu0 0.0
    %859 = vmatprep.subr.mxu0 0.0
    %860 = vmatpush1.xpose.msra.mxu0 0.0
    %861 = vmatprep.subr.mxu0 0.0
    %862 = vmatpush1.xpose.msra.mxu0 0.0
    %863 = vmatprep.subr.mxu0 0.0
    %864 = vmatpush1.xpose.msra.mxu0 0.0
    %865 = vmatprep.subr.mxu0 0.0
    %866 = vmatpush1.xpose.msra.mxu0 0.0
    %867 = vmatprep.subr.mxu0 0.0
    %868 = vmatpush1.xpose.msra.mxu0 0.0
    %869 = vmatprep.subr.mxu0 0.0
    %870 = vmatpush1.xpose.msra.mxu0 0.0
    %871 = vmatprep.subr.mxu0 0.0
    %872 = vmatpush1.xpose.msra.mxu0 0.0
    %873 = vmatprep.subr.mxu0 0.0
    %874 = vmatpush1.xpose.msra.mxu0 0.0
    %875 = vmatprep.mubr.f32.mxu0 0.0
    %876 = vmatmul.mubr.f32.gmra.mrb[0].mxu0 %v809
    %v877 = vpop.f32.mrb[0].mxu0
    %v878 = vadd.f32 0.0, %v877
    %v879 = vpop.f32.mrb[0].mxu0
    %880 = vdwg.mxu0
    %v881 = vsel %vm556, %v805, -inf
    %882 = vmax.xlane.f32.xlu0 %v881
    %v883 = vpop.xlane.xlu0 %882
    %v884 = vsel %vm556, %v878, -inf
    %885 = vmax.xlane.f32.xlu0 %v884
    %v886 = vpop.xlane.xlu0 %885
    %v887 = vsub.f32 %v805, %v883
    %v888 = vsub.f32 %v878, %v886
    %v889 = vmul.f32 %v887, 1.442695
    %v890 = vpow.pop %v889
    %v891 = vmul.f32 %v888, 1.442695
    %v892 = vpow.pop %v891
    %v893 = vsel %vm556, %v890, 0.0
    %894 = vadd.xlane.f32.xlu0 %v893
    %v895 = vpop.xlane.xlu0 %894
    %v896 = vsel %vm556, %v892, 0.0
    %897 = vadd.xlane.f32.xlu0 %v896
    %v898 = vpop.xlane.xlu0 %897
    %v899 = vrcp.pop %v895
    %v900 = vrcp.pop %v898
    %v901 = vmul.f32 %v890, %v899
    %v902 = vmul.f32 %v892, %v900
    %v904 = vsel %vm556, %v901, 0
    %906 = vmatprep.subr.mxu0 0.0
    %907 = vmatpush1.msra.mxu0 %v386
    %908 = vmatprep.subr.mxu0 0.0
    %909 = vmatpush1.msra.mxu0 0.0
    %910 = vmatprep.subr.mxu0 0.0
    %911 = vmatpush1.msra.mxu0 0.0
    %912 = vmatprep.subr.mxu0 0.0
    %913 = vmatpush1.msra.mxu0 0.0
    %914 = vmatprep.subr.mxu0 0.0
    %915 = vmatpush1.msra.mxu0 0.0
    %916 = vmatprep.subr.mxu0 0.0
    %917 = vmatpush1.msra.mxu0 0.0
    %918 = vmatprep.subr.mxu0 0.0
    %919 = vmatpush1.msra.mxu0 0.0
    %920 = vmatprep.subr.mxu0 0.0
    %921 = vmatpush1.msra.mxu0 0.0
    %922 = vmatprep.subr.mxu0 0.0
    %923 = vmatpush1.msra.mxu0 0.0
    %924 = vmatprep.subr.mxu0 0.0
    %925 = vmatpush1.msra.mxu0 0.0
    %926 = vmatprep.subr.mxu0 0.0
    %927 = vmatpush1.msra.mxu0 0.0
    %928 = vmatprep.subr.mxu0 0.0
    %929 = vmatpush1.msra.mxu0 0.0
    %930 = vmatprep.subr.mxu0 0.0
    %931 = vmatpush1.msra.mxu0 0.0
    %932 = vmatprep.subr.mxu0 0.0
    %933 = vmatpush1.msra.mxu0 0.0
    %934 = vmatprep.subr.mxu0 0.0
    %935 = vmatpush1.msra.mxu0 0.0
    %936 = vmatprep.subr.mxu0 0.0
    %937 = vmatpush1.msra.mxu0 0.0
    %938 = vmatprep.subr.mxu0 0.0
    %939 = vmatpush1.msra.mxu0 0.0
    %940 = vmatprep.subr.mxu0 0.0
    %941 = vmatpush1.msra.mxu0 0.0
    %942 = vmatprep.subr.mxu0 0.0
    %943 = vmatpush1.msra.mxu0 0.0
    %944 = vmatprep.subr.mxu0 0.0
    %945 = vmatpush1.msra.mxu0 0.0
    %946 = vmatprep.subr.mxu0 0.0
    %947 = vmatpush1.msra.mxu0 0.0
    %948 = vmatprep.subr.mxu0 0.0
    %949 = vmatpush1.msra.mxu0 0.0
    %950 = vmatprep.subr.mxu0 0.0
    %951 = vmatpush1.msra.mxu0 0.0
    %952 = vmatprep.subr.mxu0 0.0
    %953 = vmatpush1.msra.mxu0 0.0
    %954 = vmatprep.subr.mxu0 0.0
    %955 = vmatpush1.msra.mxu0 0.0
    %956 = vmatprep.subr.mxu0 0.0
    %957 = vmatpush1.msra.mxu0 0.0
    %958 = vmatprep.subr.mxu0 0.0
    %959 = vmatpush1.msra.mxu0 0.0
    %960 = vmatprep.subr.mxu0 0.0
    %961 = vmatpush1.msra.mxu0 0.0
    %962 = vmatprep.subr.mxu0 0.0
    %963 = vmatpush1.msra.mxu0 0.0
    %964 = vmatprep.subr.mxu0 0.0
    %965 = vmatpush1.msra.mxu0 0.0
    %966 = vmatprep.subr.mxu0 0.0
    %967 = vmatpush1.msra.mxu0 0.0
    %968 = vmatprep.subr.mxu0 0.0
    %969 = vmatpush1.msra.mxu0 0.0
    %970 = vmatprep.mubr.f32.mxu0 0.0
    %971 = vmatmul.mubr.f32.gmra.mrb[0].mxu0 %v904
    %v972 = vpop.f32.mrb[0].mxu0
    %v973 = vadd.f32 0.0, %v972
    %v974 = vpop.f32.mrb[0].mxu0
    %975 = vdwg.mxu0
    %v977 = vsel %vm556, %v902, 0
    %979 = vmatprep.subr.mxu0 0.0
    %980 = vmatpush1.msra.mxu0 %v391
    %981 = vmatprep.subr.mxu0 0.0
    %982 = vmatpush1.msra.mxu0 0.0
    %983 = vmatprep.subr.mxu0 0.0
    %984 = vmatpush1.msra.mxu0 0.0
    %985 = vmatprep.subr.mxu0 0.0
    %986 = vmatpush1.msra.mxu0 0.0
    %987 = vmatprep.subr.mxu0 0.0
    %988 = vmatpush1.msra.mxu0 0.0
    %989 = vmatprep.subr.mxu0 0.0
    %990 = vmatpush1.msra.mxu0 0.0
    %991 = vmatprep.subr.mxu0 0.0
    %992 = vmatpush1.msra.mxu0 0.0
    %993 = vmatprep.subr.mxu0 0.0
    %994 = vmatpush1.msra.mxu0 0.0
    %995 = vmatprep.subr.mxu0 0.0
    %996 = vmatpush1.msra.mxu0 0.0
    %997 = vmatprep.subr.mxu0 0.0
    %998 = vmatpush1.msra.mxu0 0.0
    %999 = vmatprep.subr.mxu0 0.0
    %1000 = vmatpush1.msra.mxu0 0.0
    %1001 = vmatprep.subr.mxu0 0.0
    %1002 = vmatpush1.msra.mxu0 0.0
    %1003 = vmatprep.subr.mxu0 0.0
    %1004 = vmatpush1.msra.mxu0 0.0
    %1005 = vmatprep.subr.mxu0 0.0
    %1006 = vmatpush1.msra.mxu0 0.0
    %1007 = vmatprep.subr.mxu0 0.0
    %1008 = vmatpush1.msra.mxu0 0.0
    %1009 = vmatprep.subr.mxu0 0.0
    %1010 = vmatpush1.msra.mxu0 0.0
    %1011 = vmatprep.subr.mxu0 0.0
    %1012 = vmatpush1.msra.mxu0 0.0
    %1013 = vmatprep.subr.mxu0 0.0
    %1014 = vmatpush1.msra.mxu0 0.0
    %1015 = vmatprep.subr.mxu0 0.0
    %1016 = vmatpush1.msra.mxu0 0.0
    %1017 = vmatprep.subr.mxu0 0.0
    %1018 = vmatpush1.msra.mxu0 0.0
    %1019 = vmatprep.subr.mxu0 0.0
    %1020 = vmatpush1.msra.mxu0 0.0
    %1021 = vmatprep.subr.mxu0 0.0
    %1022 = vmatpush1.msra.mxu0 0.0
    %1023 = vmatprep.subr.mxu0 0.0
    %1024 = vmatpush1.msra.mxu0 0.0
    %1025 = vmatprep.subr.mxu0 0.0
    %1026 = vmatpush1.msra.mxu0 0.0
    %1027 = vmatprep.subr.mxu0 0.0
    %1028 = vmatpush1.msra.mxu0 0.0
    %1029 = vmatprep.subr.mxu0 0.0
    %1030 = vmatpush1.msra.mxu0 0.0
    %1031 = vmatprep.subr.mxu0 0.0
    %1032 = vmatpush1.msra.mxu0 0.0
    %1033 = vmatprep.subr.mxu0 0.0
    %1034 = vmatpush1.msra.mxu0 0.0
    %1035 = vmatprep.subr.mxu0 0.0
    %1036 = vmatpush1.msra.mxu0 0.0
    %1037 = vmatprep.subr.mxu0 0.0
    %1038 = vmatpush1.msra.mxu0 0.0
    %1039 = vmatprep.subr.mxu0 0.0
    %1040 = vmatpush1.msra.mxu0 0.0
    %1041 = vmatprep.subr.mxu0 0.0
    %1042 = vmatpush1.msra.mxu0 0.0
    %1043 = vmatprep.mubr.f32.mxu0 0.0
    %1044 = vmatmul.mubr.f32.gmra.mrb[0].mxu0 %v977
    %v1045 = vpop.f32.mrb[0].mxu0
    %v1046 = vadd.f32 0.0, %v1045
    %v1047 = vpop.f32.mrb[0].mxu0
    %1048 = vdwg.mxu0
    %v1049 = vmul.f32 %v973, %v732
    %v1050 = vmul.f32 %v1046, %v732
    %v1051 = vadd.f32 %v727, %v1049
    %v1052 = vadd.f32 %v728, %v1050
    %vm1053 = vcmp.ge.s32.totalorder %v397, 16
    %vm1054 = vcmp.lt.s32.totalorder %v397, 24
    %vm1055 = vmand %vm1053, %vm1054
    %v1056 = vsel %vm1055, 1.0, 0.0
    %v1057 = vmul.f32 %v394, %v1056
    %v1058 = vmul.f32 %v395, %v1056
    %v1060 = vsel %vm140, %v1057, 0
    %1062 = vmatprep.subr.mxu0 0.0
    %1063 = vmatpush1.xpose.msra.mxu0 %v408
    %1064 = vmatprep.subr.mxu0 0.0
    %1065 = vmatpush1.xpose.msra.mxu0 0.0
    %1066 = vmatprep.subr.mxu0 0.0
    %1067 = vmatpush1.xpose.msra.mxu0 0.0
    %1068 = vmatprep.subr.mxu0 0.0
    %1069 = vmatpush1.xpose.msra.mxu0 0.0
    %1070 = vmatprep.subr.mxu0 0.0
    %1071 = vmatpush1.xpose.msra.mxu0 0.0
    %1072 = vmatprep.subr.mxu0 0.0
    %1073 = vmatpush1.xpose.msra.mxu0 0.0
    %1074 = vmatprep.subr.mxu0 0.0
    %1075 = vmatpush1.xpose.msra.mxu0 0.0
    %1076 = vmatprep.subr.mxu0 0.0
    %1077 = vmatpush1.xpose.msra.mxu0 0.0
    %1078 = vmatprep.subr.mxu0 0.0
    %1079 = vmatpush1.xpose.msra.mxu0 0.0
    %1080 = vmatprep.subr.mxu0 0.0
    %1081 = vmatpush1.xpose.msra.mxu0 0.0
    %1082 = vmatprep.subr.mxu0 0.0
    %1083 = vmatpush1.xpose.msra.mxu0 0.0
    %1084 = vmatprep.subr.mxu0 0.0
    %1085 = vmatpush1.xpose.msra.mxu0 0.0
    %1086 = vmatprep.subr.mxu0 0.0
    %1087 = vmatpush1.xpose.msra.mxu0 0.0
    %1088 = vmatprep.subr.mxu0 0.0
    %1089 = vmatpush1.xpose.msra.mxu0 0.0
    %1090 = vmatprep.subr.mxu0 0.0
    %1091 = vmatpush1.xpose.msra.mxu0 0.0
    %1092 = vmatprep.subr.mxu0 0.0
    %1093 = vmatpush1.xpose.msra.mxu0 0.0
    %1094 = vmatprep.subr.mxu0 0.0
    %1095 = vmatpush1.xpose.msra.mxu0 0.0
    %1096 = vmatprep.subr.mxu0 0.0
    %1097 = vmatpush1.xpose.msra.mxu0 0.0
    %1098 = vmatprep.subr.mxu0 0.0
    %1099 = vmatpush1.xpose.msra.mxu0 0.0
    %1100 = vmatprep.subr.mxu0 0.0
    %1101 = vmatpush1.xpose.msra.mxu0 0.0
    %1102 = vmatprep.subr.mxu0 0.0
    %1103 = vmatpush1.xpose.msra.mxu0 0.0
    %1104 = vmatprep.subr.mxu0 0.0
    %1105 = vmatpush1.xpose.msra.mxu0 0.0
    %1106 = vmatprep.subr.mxu0 0.0
    %1107 = vmatpush1.xpose.msra.mxu0 0.0
    %1108 = vmatprep.subr.mxu0 0.0
    %1109 = vmatpush1.xpose.msra.mxu0 0.0
    %1110 = vmatprep.subr.mxu0 0.0
    %1111 = vmatpush1.xpose.msra.mxu0 0.0
    %1112 = vmatprep.subr.mxu0 0.0
    %1113 = vmatpush1.xpose.msra.mxu0 0.0
    %1114 = vmatprep.subr.mxu0 0.0
    %1115 = vmatpush1.xpose.msra.mxu0 0.0
    %1116 = vmatprep.subr.mxu0 0.0
    %1117 = vmatpush1.xpose.msra.mxu0 0.0
    %1118 = vmatprep.subr.mxu0 0.0
    %1119 = vmatpush1.xpose.msra.mxu0 0.0
    %1120 = vmatprep.subr.mxu0 0.0
    %1121 = vmatpush1.xpose.msra.mxu0 0.0
    %1122 = vmatprep.subr.mxu0 0.0
    %1123 = vmatpush1.xpose.msra.mxu0 0.0
    %1124 = vmatprep.subr.mxu0 0.0
    %1125 = vmatpush1.xpose.msra.mxu0 0.0
    %1126 = vmatprep.mubr.f32.mxu0 0.0
    %1127 = vmatmul.mubr.f32.gmra.mrb[0].mxu0 %v1060
    %v1128 = vpop.f32.mrb[0].mxu0
    %v1129 = vadd.f32 0.0, %v1128
    %v1130 = vpop.f32.mrb[0].mxu0
    %1131 = vdwg.mxu0
    %v1133 = vsel %vm140, %v1058, 0
    %1135 = vmatprep.subr.mxu0 0.0
    %1136 = vmatpush1.xpose.msra.mxu0 %v484
    %1137 = vmatprep.subr.mxu0 0.0
    %1138 = vmatpush1.xpose.msra.mxu0 0.0
    %1139 = vmatprep.subr.mxu0 0.0
    %1140 = vmatpush1.xpose.msra.mxu0 0.0
    %1141 = vmatprep.subr.mxu0 0.0
    %1142 = vmatpush1.xpose.msra.mxu0 0.0
    %1143 = vmatprep.subr.mxu0 0.0
    %1144 = vmatpush1.xpose.msra.mxu0 0.0
    %1145 = vmatprep.subr.mxu0 0.0
    %1146 = vmatpush1.xpose.msra.mxu0 0.0
    %1147 = vmatprep.subr.mxu0 0.0
    %1148 = vmatpush1.xpose.msra.mxu0 0.0
    %1149 = vmatprep.subr.mxu0 0.0
    %1150 = vmatpush1.xpose.msra.mxu0 0.0
    %1151 = vmatprep.subr.mxu0 0.0
    %1152 = vmatpush1.xpose.msra.mxu0 0.0
    %1153 = vmatprep.subr.mxu0 0.0
    %1154 = vmatpush1.xpose.msra.mxu0 0.0
    %1155 = vmatprep.subr.mxu0 0.0
    %1156 = vmatpush1.xpose.msra.mxu0 0.0
    %1157 = vmatprep.subr.mxu0 0.0
    %1158 = vmatpush1.xpose.msra.mxu0 0.0
    %1159 = vmatprep.subr.mxu0 0.0
    %1160 = vmatpush1.xpose.msra.mxu0 0.0
    %1161 = vmatprep.subr.mxu0 0.0
    %1162 = vmatpush1.xpose.msra.mxu0 0.0
    %1163 = vmatprep.subr.mxu0 0.0
    %1164 = vmatpush1.xpose.msra.mxu0 0.0
    %1165 = vmatprep.subr.mxu0 0.0
    %1166 = vmatpush1.xpose.msra.mxu0 0.0
    %1167 = vmatprep.subr.mxu0 0.0
    %1168 = vmatpush1.xpose.msra.mxu0 0.0
    %1169 = vmatprep.subr.mxu0 0.0
    %1170 = vmatpush1.xpose.msra.mxu0 0.0
    %1171 = vmatprep.subr.mxu0 0.0
    %1172 = vmatpush1.xpose.msra.mxu0 0.0
    %1173 = vmatprep.subr.mxu0 0.0
    %1174 = vmatpush1.xpose.msra.mxu0 0.0
    %1175 = vmatprep.subr.mxu0 0.0
    %1176 = vmatpush1.xpose.msra.mxu0 0.0
    %1177 = vmatprep.subr.mxu0 0.0
    %1178 = vmatpush1.xpose.msra.mxu0 0.0
    %1179 = vmatprep.subr.mxu0 0.0
    %1180 = vmatpush1.xpose.msra.mxu0 0.0
    %1181 = vmatprep.subr.mxu0 0.0
    %1182 = vmatpush1.xpose.msra.mxu0 0.0
    %1183 = vmatprep.subr.mxu0 0.0
    %1184 = vmatpush1.xpose.msra.mxu0 0.0
    %1185 = vmatprep.subr.mxu0 0.0
    %1186 = vmatpush1.xpose.msra.mxu0 0.0
    %1187 = vmatprep.subr.mxu0 0.0
    %1188 = vmatpush1.xpose.msra.mxu0 0.0
    %1189 = vmatprep.subr.mxu0 0.0
    %1190 = vmatpush1.xpose.msra.mxu0 0.0
    %1191 = vmatprep.subr.mxu0 0.0
    %1192 = vmatpush1.xpose.msra.mxu0 0.0
    %1193 = vmatprep.subr.mxu0 0.0
    %1194 = vmatpush1.xpose.msra.mxu0 0.0
    %1195 = vmatprep.subr.mxu0 0.0
    %1196 = vmatpush1.xpose.msra.mxu0 0.0
    %1197 = vmatprep.subr.mxu0 0.0
    %1198 = vmatpush1.xpose.msra.mxu0 0.0
    %1199 = vmatprep.mubr.f32.mxu0 0.0
    %1200 = vmatmul.mubr.f32.gmra.mrb[0].mxu0 %v1133
    %v1201 = vpop.f32.mrb[0].mxu0
    %v1202 = vadd.f32 0.0, %v1201
    %v1203 = vpop.f32.mrb[0].mxu0
    %1204 = vdwg.mxu0
    %v1205 = vsel %vm556, %v1129, -inf
    %1206 = vmax.xlane.f32.xlu0 %v1205
    %v1207 = vpop.xlane.xlu0 %1206
    %v1208 = vsel %vm556, %v1202, -inf
    %1209 = vmax.xlane.f32.xlu0 %v1208
    %v1210 = vpop.xlane.xlu0 %1209
    %v1211 = vsub.f32 %v1129, %v1207
    %v1212 = vsub.f32 %v1202, %v1210
    %v1213 = vmul.f32 %v1211, 1.442695
    %v1214 = vpow.pop %v1213
    %v1215 = vmul.f32 %v1212, 1.442695
    %v1216 = vpow.pop %v1215
    %v1217 = vsel %vm556, %v1214, 0.0
    %1218 = vadd.xlane.f32.xlu0 %v1217
    %v1219 = vpop.xlane.xlu0 %1218
    %v1220 = vsel %vm556, %v1216, 0.0
    %1221 = vadd.xlane.f32.xlu0 %v1220
    %v1222 = vpop.xlane.xlu0 %1221
    %v1223 = vrcp.pop %v1219
    %v1224 = vrcp.pop %v1222
    %v1225 = vmul.f32 %v1214, %v1223
    %v1226 = vmul.f32 %v1216, %v1224
    %v1228 = vsel %vm556, %v1225, 0
    %1230 = vmatprep.subr.mxu0 0.0
    %1231 = vmatpush1.msra.mxu0 %v386
    %1232 = vmatprep.subr.mxu0 0.0
    %1233 = vmatpush1.msra.mxu0 0.0
    %1234 = vmatprep.subr.mxu0 0.0
    %1235 = vmatpush1.msra.mxu0 0.0
    %1236 = vmatprep.subr.mxu0 0.0
    %1237 = vmatpush1.msra.mxu0 0.0
    %1238 = vmatprep.subr.mxu0 0.0
    %1239 = vmatpush1.msra.mxu0 0.0
    %1240 = vmatprep.subr.mxu0 0.0
    %1241 = vmatpush1.msra.mxu0 0.0
    %1242 = vmatprep.subr.mxu0 0.0
    %1243 = vmatpush1.msra.mxu0 0.0
    %1244 = vmatprep.subr.mxu0 0.0
    %1245 = vmatpush1.msra.mxu0 0.0
    %1246 = vmatprep.subr.mxu0 0.0
    %1247 = vmatpush1.msra.mxu0 0.0
    %1248 = vmatprep.subr.mxu0 0.0
    %1249 = vmatpush1.msra.mxu0 0.0
    %1250 = vmatprep.subr.mxu0 0.0
    %1251 = vmatpush1.msra.mxu0 0.0
    %1252 = vmatprep.subr.mxu0 0.0
    %1253 = vmatpush1.msra.mxu0 0.0
    %1254 = vmatprep.subr.mxu0 0.0
    %1255 = vmatpush1.msra.mxu0 0.0
    %1256 = vmatprep.subr.mxu0 0.0
    %1257 = vmatpush1.msra.mxu0 0.0
    %1258 = vmatprep.subr.mxu0 0.0
    %1259 = vmatpush1.msra.mxu0 0.0
    %1260 = vmatprep.subr.mxu0 0.0
    %1261 = vmatpush1.msra.mxu0 0.0
    %1262 = vmatprep.subr.mxu0 0.0
    %1263 = vmatpush1.msra.mxu0 0.0
    %1264 = vmatprep.subr.mxu0 0.0
    %1265 = vmatpush1.msra.mxu0 0.0
    %1266 = vmatprep.subr.mxu0 0.0
    %1267 = vmatpush1.msra.mxu0 0.0
    %1268 = vmatprep.subr.mxu0 0.0
    %1269 = vmatpush1.msra.mxu0 0.0
    %1270 = vmatprep.subr.mxu0 0.0
    %1271 = vmatpush1.msra.mxu0 0.0
    %1272 = vmatprep.subr.mxu0 0.0
    %1273 = vmatpush1.msra.mxu0 0.0
    %1274 = vmatprep.subr.mxu0 0.0
    %1275 = vmatpush1.msra.mxu0 0.0
    %1276 = vmatprep.subr.mxu0 0.0
    %1277 = vmatpush1.msra.mxu0 0.0
    %1278 = vmatprep.subr.mxu0 0.0
    %1279 = vmatpush1.msra.mxu0 0.0
    %1280 = vmatprep.subr.mxu0 0.0
    %1281 = vmatpush1.msra.mxu0 0.0
    %1282 = vmatprep.subr.mxu0 0.0
    %1283 = vmatpush1.msra.mxu0 0.0
    %1284 = vmatprep.subr.mxu0 0.0
    %1285 = vmatpush1.msra.mxu0 0.0
    %1286 = vmatprep.subr.mxu0 0.0
    %1287 = vmatpush1.msra.mxu0 0.0
    %1288 = vmatprep.subr.mxu0 0.0
    %1289 = vmatpush1.msra.mxu0 0.0
    %1290 = vmatprep.subr.mxu0 0.0
    %1291 = vmatpush1.msra.mxu0 0.0
    %1292 = vmatprep.subr.mxu0 0.0
    %1293 = vmatpush1.msra.mxu0 0.0
    %1294 = vmatprep.mubr.f32.mxu0 0.0
    %1295 = vmatmul.mubr.f32.gmra.mrb[0].mxu0 %v1228
    %v1296 = vpop.f32.mrb[0].mxu0
    %v1297 = vadd.f32 0.0, %v1296
    %v1298 = vpop.f32.mrb[0].mxu0
    %1299 = vdwg.mxu0
    %v1301 = vsel %vm556, %v1226, 0
    %1303 = vmatprep.subr.mxu0 0.0
    %1304 = vmatpush1.msra.mxu0 %v391
    %1305 = vmatprep.subr.mxu0 0.0
    %1306 = vmatpush1.msra.mxu0 0.0
    %1307 = vmatprep.subr.mxu0 0.0
    %1308 = vmatpush1.msra.mxu0 0.0
    %1309 = vmatprep.subr.mxu0 0.0
    %1310 = vmatpush1.msra.mxu0 0.0
    %1311 = vmatprep.subr.mxu0 0.0
    %1312 = vmatpush1.msra.mxu0 0.0
    %1313 = vmatprep.subr.mxu0 0.0
    %1314 = vmatpush1.msra.mxu0 0.0
    %1315 = vmatprep.subr.mxu0 0.0
    %1316 = vmatpush1.msra.mxu0 0.0
    %1317 = vmatprep.subr.mxu0 0.0
    %1318 = vmatpush1.msra.mxu0 0.0
    %1319 = vmatprep.subr.mxu0 0.0
    %1320 = vmatpush1.msra.mxu0 0.0
    %1321 = vmatprep.subr.mxu0 0.0
    %1322 = vmatpush1.msra.mxu0 0.0
    %1323 = vmatprep.subr.mxu0 0.0
    %1324 = vmatpush1.msra.mxu0 0.0
    %1325 = vmatprep.subr.mxu0 0.0
    %1326 = vmatpush1.msra.mxu0 0.0
    %1327 = vmatprep.subr.mxu0 0.0
    %1328 = vmatpush1.msra.mxu0 0.0
    %1329 = vmatprep.subr.mxu0 0.0
    %1330 = vmatpush1.msra.mxu0 0.0
    %1331 = vmatprep.subr.mxu0 0.0
    %1332 = vmatpush1.msra.mxu0 0.0
    %1333 = vmatprep.subr.mxu0 0.0
    %1334 = vmatpush1.msra.mxu0 0.0
    %1335 = vmatprep.subr.mxu0 0.0
    %1336 = vmatpush1.msra.mxu0 0.0
    %1337 = vmatprep.subr.mxu0 0.0
    %1338 = vmatpush1.msra.mxu0 0.0
    %1339 = vmatprep.subr.mxu0 0.0
    %1340 = vmatpush1.msra.mxu0 0.0
    %1341 = vmatprep.subr.mxu0 0.0
    %1342 = vmatpush1.msra.mxu0 0.0
    %1343 = vmatprep.subr.mxu0 0.0
    %1344 = vmatpush1.msra.mxu0 0.0
    %1345 = vmatprep.subr.mxu0 0.0
    %1346 = vmatpush1.msra.mxu0 0.0
    %1347 = vmatprep.subr.mxu0 0.0
    %1348 = vmatpush1.msra.mxu0 0.0
    %1349 = vmatprep.subr.mxu0 0.0
    %1350 = vmatpush1.msra.mxu0 0.0
    %1351 = vmatprep.subr.mxu0 0.0
    %1352 = vmatpush1.msra.mxu0 0.0
    %1353 = vmatprep.subr.mxu0 0.0
    %1354 = vmatpush1.msra.mxu0 0.0
    %1355 = vmatprep.subr.mxu0 0.0
    %1356 = vmatpush1.msra.mxu0 0.0
    %1357 = vmatprep.subr.mxu0 0.0
    %1358 = vmatpush1.msra.mxu0 0.0
    %1359 = vmatprep.subr.mxu0 0.0
    %1360 = vmatpush1.msra.mxu0 0.0
    %1361 = vmatprep.subr.mxu0 0.0
    %1362 = vmatpush1.msra.mxu0 0.0
    %1363 = vmatprep.subr.mxu0 0.0
    %1364 = vmatpush1.msra.mxu0 0.0
    %1365 = vmatprep.subr.mxu0 0.0
    %1366 = vmatpush1.msra.mxu0 0.0
    %1367 = vmatprep.mubr.f32.mxu0 0.0
    %1368 = vmatmul.mubr.f32.gmra.mrb[0].mxu0 %v1301
    %v1369 = vpop.f32.mrb[0].mxu0
    %v1370 = vadd.f32 0.0, %v1369
    %v1371 = vpop.f32.mrb[0].mxu0
    %1372 = vdwg.mxu0
    %v1373 = vmul.f32 %v1297, %v1056
    %v1374 = vmul.f32 %v1370, %v1056
    %v1375 = vadd.f32 %v1051, %v1373
    %v1376 = vadd.f32 %v1052, %v1374
    %vm1377 = vcmp.ge.s32.totalorder %v397, 24
    %vm1378 = vcmp.lt.s32.totalorder %v397, 32
    %vm1379 = vmand %vm1377, %vm1378
    %v1380 = vsel %vm1379, 1.0, 0.0
    %v1381 = vmul.f32 %v394, %v1380
    %v1382 = vmul.f32 %v395, %v1380
    %v1384 = vsel %vm140, %v1381, 0
    %1386 = vmatprep.subr.mxu0 0.0
    %1387 = vmatpush1.xpose.msra.mxu0 %v408
    %1388 = vmatprep.subr.mxu0 0.0
    %1389 = vmatpush1.xpose.msra.mxu0 0.0
    %1390 = vmatprep.subr.mxu0 0.0
    %1391 = vmatpush1.xpose.msra.mxu0 0.0
    %1392 = vmatprep.subr.mxu0 0.0
    %1393 = vmatpush1.xpose.msra.mxu0 0.0
    %1394 = vmatprep.subr.mxu0 0.0
    %1395 = vmatpush1.xpose.msra.mxu0 0.0
    %1396 = vmatprep.subr.mxu0 0.0
    %1397 = vmatpush1.xpose.msra.mxu0 0.0
    %1398 = vmatprep.subr.mxu0 0.0
    %1399 = vmatpush1.xpose.msra.mxu0 0.0
    %1400 = vmatprep.subr.mxu0 0.0
    %1401 = vmatpush1.xpose.msra.mxu0 0.0
    %1402 = vmatprep.subr.mxu0 0.0
    %1403 = vmatpush1.xpose.msra.mxu0 0.0
    %1404 = vmatprep.subr.mxu0 0.0
    %1405 = vmatpush1.xpose.msra.mxu0 0.0
    %1406 = vmatprep.subr.mxu0 0.0
    %1407 = vmatpush1.xpose.msra.mxu0 0.0
    %1408 = vmatprep.subr.mxu0 0.0
    %1409 = vmatpush1.xpose.msra.mxu0 0.0
    %1410 = vmatprep.subr.mxu0 0.0
    %1411 = vmatpush1.xpose.msra.mxu0 0.0
    %1412 = vmatprep.subr.mxu0 0.0
    %1413 = vmatpush1.xpose.msra.mxu0 0.0
    %1414 = vmatprep.subr.mxu0 0.0
    %1415 = vmatpush1.xpose.msra.mxu0 0.0
    %1416 = vmatprep.subr.mxu0 0.0
    %1417 = vmatpush1.xpose.msra.mxu0 0.0
    %1418 = vmatprep.subr.mxu0 0.0
    %1419 = vmatpush1.xpose.msra.mxu0 0.0
    %1420 = vmatprep.subr.mxu0 0.0
    %1421 = vmatpush1.xpose.msra.mxu0 0.0
    %1422 = vmatprep.subr.mxu0 0.0
    %1423 = vmatpush1.xpose.msra.mxu0 0.0
    %1424 = vmatprep.subr.mxu0 0.0
    %1425 = vmatpush1.xpose.msra.mxu0 0.0
    %1426 = vmatprep.subr.mxu0 0.0
    %1427 = vmatpush1.xpose.msra.mxu0 0.0
    %1428 = vmatprep.subr.mxu0 0.0
    %1429 = vmatpush1.xpose.msra.mxu0 0.0
    %1430 = vmatprep.subr.mxu0 0.0
    %1431 = vmatpush1.xpose.msra.mxu0 0.0
    %1432 = vmatprep.subr.mxu0 0.0
    %1433 = vmatpush1.xpose.msra.mxu0 0.0
    %1434 = vmatprep.subr.mxu0 0.0
    %1435 = vmatpush1.xpose.msra.mxu0 0.0
    %1436 = vmatprep.subr.mxu0 0.0
    %1437 = vmatpush1.xpose.msra.mxu0 0.0
    %1438 = vmatprep.subr.mxu0 0.0
    %1439 = vmatpush1.xpose.msra.mxu0 0.0
    %1440 = vmatprep.subr.mxu0 0.0
    %1441 = vmatpush1.xpose.msra.mxu0 0.0
    %1442 = vmatprep.subr.mxu0 0.0
    %1443 = vmatpush1.xpose.msra.mxu0 0.0
    %1444 = vmatprep.subr.mxu0 0.0
    %1445 = vmatpush1.xpose.msra.mxu0 0.0
    %1446 = vmatprep.subr.mxu0 0.0
    %1447 = vmatpush1.xpose.msra.mxu0 0.0
    %1448 = vmatprep.subr.mxu0 0.0
    %1449 = vmatpush1.xpose.msra.mxu0 0.0
    %1450 = vmatprep.mubr.f32.mxu0 0.0
    %1451 = vmatmul.mubr.f32.gmra.mrb[0].mxu0 %v1384
    %v1452 = vpop.f32.mrb[0].mxu0
    %v1453 = vadd.f32 0.0, %v1452
    %v1454 = vpop.f32.mrb[0].mxu0
    %1455 = vdwg.mxu0
    %v1457 = vsel %vm140, %v1382, 0
    %1459 = vmatprep.subr.mxu0 0.0
    %1460 = vmatpush1.xpose.msra.mxu0 %v484
    %1461 = vmatprep.subr.mxu0 0.0
    %1462 = vmatpush1.xpose.msra.mxu0 0.0
    %1463 = vmatprep.subr.mxu0 0.0
    %1464 = vmatpush1.xpose.msra.mxu0 0.0
    %1465 = vmatprep.subr.mxu0 0.0
    %1466 = vmatpush1.xpose.msra.mxu0 0.0
    %1467 = vmatprep.subr.mxu0 0.0
    %1468 = vmatpush1.xpose.msra.mxu0 0.0
    %1469 = vmatprep.subr.mxu0 0.0
    %1470 = vmatpush1.xpose.msra.mxu0 0.0
    %1471 = vmatprep.subr.mxu0 0.0
    %1472 = vmatpush1.xpose.msra.mxu0 0.0
    %1473 = vmatprep.subr.mxu0 0.0
    %1474 = vmatpush1.xpose.msra.mxu0 0.0
    %1475 = vmatprep.subr.mxu0 0.0
    %1476 = vmatpush1.xpose.msra.mxu0 0.0
    %1477 = vmatprep.subr.mxu0 0.0
    %1478 = vmatpush1.xpose.msra.mxu0 0.0
    %1479 = vmatprep.subr.mxu0 0.0
    %1480 = vmatpush1.xpose.msra.mxu0 0.0
    %1481 = vmatprep.subr.mxu0 0.0
    %1482 = vmatpush1.xpose.msra.mxu0 0.0
    %1483 = vmatprep.subr.mxu0 0.0
    %1484 = vmatpush1.xpose.msra.mxu0 0.0
    %1485 = vmatprep.subr.mxu0 0.0
    %1486 = vmatpush1.xpose.msra.mxu0 0.0
    %1487 = vmatprep.subr.mxu0 0.0
    %1488 = vmatpush1.xpose.msra.mxu0 0.0
    %1489 = vmatprep.subr.mxu0 0.0
    %1490 = vmatpush1.xpose.msra.mxu0 0.0
    %1491 = vmatprep.subr.mxu0 0.0
    %1492 = vmatpush1.xpose.msra.mxu0 0.0
    %1493 = vmatprep.subr.mxu0 0.0
    %1494 = vmatpush1.xpose.msra.mxu0 0.0
    %1495 = vmatprep.subr.mxu0 0.0
    %1496 = vmatpush1.xpose.msra.mxu0 0.0
    %1497 = vmatprep.subr.mxu0 0.0
    %1498 = vmatpush1.xpose.msra.mxu0 0.0
    %1499 = vmatprep.subr.mxu0 0.0
    %1500 = vmatpush1.xpose.msra.mxu0 0.0
    %1501 = vmatprep.subr.mxu0 0.0
    %1502 = vmatpush1.xpose.msra.mxu0 0.0
    %1503 = vmatprep.subr.mxu0 0.0
    %1504 = vmatpush1.xpose.msra.mxu0 0.0
    %1505 = vmatprep.subr.mxu0 0.0
    %1506 = vmatpush1.xpose.msra.mxu0 0.0
    %1507 = vmatprep.subr.mxu0 0.0
    %1508 = vmatpush1.xpose.msra.mxu0 0.0
    %1509 = vmatprep.subr.mxu0 0.0
    %1510 = vmatpush1.xpose.msra.mxu0 0.0
    %1511 = vmatprep.subr.mxu0 0.0
    %1512 = vmatpush1.xpose.msra.mxu0 0.0
    %1513 = vmatprep.subr.mxu0 0.0
    %1514 = vmatpush1.xpose.msra.mxu0 0.0
    %1515 = vmatprep.subr.mxu0 0.0
    %1516 = vmatpush1.xpose.msra.mxu0 0.0
    %1517 = vmatprep.subr.mxu0 0.0
    %1518 = vmatpush1.xpose.msra.mxu0 0.0
    %1519 = vmatprep.subr.mxu0 0.0
    %1520 = vmatpush1.xpose.msra.mxu0 0.0
    %1521 = vmatprep.subr.mxu0 0.0
    %1522 = vmatpush1.xpose.msra.mxu0 0.0
    %1523 = vmatprep.mubr.f32.mxu0 0.0
    %1524 = vmatmul.mubr.f32.gmra.mrb[0].mxu0 %v1457
    %v1525 = vpop.f32.mrb[0].mxu0
    %v1526 = vadd.f32 0.0, %v1525
    %v1527 = vpop.f32.mrb[0].mxu0
    %1528 = vdwg.mxu0
    %v1529 = vsel %vm556, %v1453, -inf
    %1530 = vmax.xlane.f32.xlu0 %v1529
    %v1531 = vpop.xlane.xlu0 %1530
    %v1532 = vsel %vm556, %v1526, -inf
    %1533 = vmax.xlane.f32.xlu0 %v1532
    %v1534 = vpop.xlane.xlu0 %1533
    %v1535 = vsub.f32 %v1453, %v1531
    %v1536 = vsub.f32 %v1526, %v1534
    %v1537 = vmul.f32 %v1535, 1.442695
    %v1538 = vpow.pop %v1537
    %v1539 = vmul.f32 %v1536, 1.442695
    %v1540 = vpow.pop %v1539
    %v1541 = vsel %vm556, %v1538, 0.0
    %1542 = vadd.xlane.f32.xlu0 %v1541
    %v1543 = vpop.xlane.xlu0 %1542
    %v1544 = vsel %vm556, %v1540, 0.0
    %1545 = vadd.xlane.f32.xlu0 %v1544
    %v1546 = vpop.xlane.xlu0 %1545
    %v1547 = vrcp.pop %v1543
    %v1548 = vrcp.pop %v1546
    %v1549 = vmul.f32 %v1538, %v1547
    %v1550 = vmul.f32 %v1540, %v1548
    %v1552 = vsel %vm556, %v1549, 0
    %1554 = vmatprep.subr.mxu0 0.0
    %1555 = vmatpush1.msra.mxu0 %v386
    %1556 = vmatprep.subr.mxu0 0.0
    %1557 = vmatpush1.msra.mxu0 0.0
    %1558 = vmatprep.subr.mxu0 0.0
    %1559 = vmatpush1.msra.mxu0 0.0
    %1560 = vmatprep.subr.mxu0 0.0
    %1561 = vmatpush1.msra.mxu0 0.0
    %1562 = vmatprep.subr.mxu0 0.0
    %1563 = vmatpush1.msra.mxu0 0.0
    %1564 = vmatprep.subr.mxu0 0.0
    %1565 = vmatpush1.msra.mxu0 0.0
    %1566 = vmatprep.subr.mxu0 0.0
    %1567 = vmatpush1.msra.mxu0 0.0
    %1568 = vmatprep.subr.mxu0 0.0
    %1569 = vmatpush1.msra.mxu0 0.0
    %1570 = vmatprep.subr.mxu0 0.0
    %1571 = vmatpush1.msra.mxu0 0.0
    %1572 = vmatprep.subr.mxu0 0.0
    %1573 = vmatpush1.msra.mxu0 0.0
    %1574 = vmatprep.subr.mxu0 0.0
    %1575 = vmatpush1.msra.mxu0 0.0
    %1576 = vmatprep.subr.mxu0 0.0
    %1577 = vmatpush1.msra.mxu0 0.0
    %1578 = vmatprep.subr.mxu0 0.0
    %1579 = vmatpush1.msra.mxu0 0.0
    %1580 = vmatprep.subr.mxu0 0.0
    %1581 = vmatpush1.msra.mxu0 0.0
    %1582 = vmatprep.subr.mxu0 0.0
    %1583 = vmatpush1.msra.mxu0 0.0
    %1584 = vmatprep.subr.mxu0 0.0
    %1585 = vmatpush1.msra.mxu0 0.0
    %1586 = vmatprep.subr.mxu0 0.0
    %1587 = vmatpush1.msra.mxu0 0.0
    %1588 = vmatprep.subr.mxu0 0.0
    %1589 = vmatpush1.msra.mxu0 0.0
    %1590 = vmatprep.subr.mxu0 0.0
    %1591 = vmatpush1.msra.mxu0 0.0
    %1592 = vmatprep.subr.mxu0 0.0
    %1593 = vmatpush1.msra.mxu0 0.0
    %1594 = vmatprep.subr.mxu0 0.0
    %1595 = vmatpush1.msra.mxu0 0.0
    %1596 = vmatprep.subr.mxu0 0.0
    %1597 = vmatpush1.msra.mxu0 0.0
    %1598 = vmatprep.subr.mxu0 0.0
    %1599 = vmatpush1.msra.mxu0 0.0
    %1600 = vmatprep.subr.mxu0 0.0
    %1601 = vmatpush1.msra.mxu0 0.0
    %1602 = vmatprep.subr.mxu0 0.0
    %1603 = vmatpush1.msra.mxu0 0.0
    %1604 = vmatprep.subr.mxu0 0.0
    %1605 = vmatpush1.msra.mxu0 0.0
    %1606 = vmatprep.subr.mxu0 0.0
    %1607 = vmatpush1.msra.mxu0 0.0
    %1608 = vmatprep.subr.mxu0 0.0
    %1609 = vmatpush1.msra.mxu0 0.0
    %1610 = vmatprep.subr.mxu0 0.0
    %1611 = vmatpush1.msra.mxu0 0.0
    %1612 = vmatprep.subr.mxu0 0.0
    %1613 = vmatpush1.msra.mxu0 0.0
    %1614 = vmatprep.subr.mxu0 0.0
    %1615 = vmatpush1.msra.mxu0 0.0
    %1616 = vmatprep.subr.mxu0 0.0
    %1617 = vmatpush1.msra.mxu0 0.0
    %1618 = vmatprep.mubr.f32.mxu0 0.0
    %1619 = vmatmul.mubr.f32.gmra.mrb[0].mxu0 %v1552
    %v1620 = vpop.f32.mrb[0].mxu0
    %v1621 = vadd.f32 0.0, %v1620
    %v1622 = vpop.f32.mrb[0].mxu0
    %1623 = vdwg.mxu0
    %v1625 = vsel %vm556, %v1550, 0
    %1627 = vmatprep.subr.mxu0 0.0
    %1628 = vmatpush1.msra.mxu0 %v391
    %1629 = vmatprep.subr.mxu0 0.0
    %1630 = vmatpush1.msra.mxu0 0.0
    %1631 = vmatprep.subr.mxu0 0.0
    %1632 = vmatpush1.msra.mxu0 0.0
    %1633 = vmatprep.subr.mxu0 0.0
    %1634 = vmatpush1.msra.mxu0 0.0
    %1635 = vmatprep.subr.mxu0 0.0
    %1636 = vmatpush1.msra.mxu0 0.0
    %1637 = vmatprep.subr.mxu0 0.0
    %1638 = vmatpush1.msra.mxu0 0.0
    %1639 = vmatprep.subr.mxu0 0.0
    %1640 = vmatpush1.msra.mxu0 0.0
    %1641 = vmatprep.subr.mxu0 0.0
    %1642 = vmatpush1.msra.mxu0 0.0
    %1643 = vmatprep.subr.mxu0 0.0
    %1644 = vmatpush1.msra.mxu0 0.0
    %1645 = vmatprep.subr.mxu0 0.0
    %1646 = vmatpush1.msra.mxu0 0.0
    %1647 = vmatprep.subr.mxu0 0.0
    %1648 = vmatpush1.msra.mxu0 0.0
    %1649 = vmatprep.subr.mxu0 0.0
    %1650 = vmatpush1.msra.mxu0 0.0
    %1651 = vmatprep.subr.mxu0 0.0
    %1652 = vmatpush1.msra.mxu0 0.0
    %1653 = vmatprep.subr.mxu0 0.0
    %1654 = vmatpush1.msra.mxu0 0.0
    %1655 = vmatprep.subr.mxu0 0.0
    %1656 = vmatpush1.msra.mxu0 0.0
    %1657 = vmatprep.subr.mxu0 0.0
    %1658 = vmatpush1.msra.mxu0 0.0
    %1659 = vmatprep.subr.mxu0 0.0
    %1660 = vmatpush1.msra.mxu0 0.0
    %1661 = vmatprep.subr.mxu0 0.0
    %1662 = vmatpush1.msra.mxu0 0.0
    %1663 = vmatprep.subr.mxu0 0.0
    %1664 = vmatpush1.msra.mxu0 0.0
    %1665 = vmatprep.subr.mxu0 0.0
    %1666 = vmatpush1.msra.mxu0 0.0
    %1667 = vmatprep.subr.mxu0 0.0
    %1668 = vmatpush1.msra.mxu0 0.0
    %1669 = vmatprep.subr.mxu0 0.0
    %1670 = vmatpush1.msra.mxu0 0.0
    %1671 = vmatprep.subr.mxu0 0.0
    %1672 = vmatpush1.msra.mxu0 0.0
    %1673 = vmatprep.subr.mxu0 0.0
    %1674 = vmatpush1.msra.mxu0 0.0
    %1675 = vmatprep.subr.mxu0 0.0
    %1676 = vmatpush1.msra.mxu0 0.0
    %1677 = vmatprep.subr.mxu0 0.0
    %1678 = vmatpush1.msra.mxu0 0.0
    %1679 = vmatprep.subr.mxu0 0.0
    %1680 = vmatpush1.msra.mxu0 0.0
    %1681 = vmatprep.subr.mxu0 0.0
    %1682 = vmatpush1.msra.mxu0 0.0
    %1683 = vmatprep.subr.mxu0 0.0
    %1684 = vmatpush1.msra.mxu0 0.0
    %1685 = vmatprep.subr.mxu0 0.0
    %1686 = vmatpush1.msra.mxu0 0.0
    %1687 = vmatprep.subr.mxu0 0.0
    %1688 = vmatpush1.msra.mxu0 0.0
    %1689 = vmatprep.subr.mxu0 0.0
    %1690 = vmatpush1.msra.mxu0 0.0
    %1691 = vmatprep.mubr.f32.mxu0 0.0
    %1692 = vmatmul.mubr.f32.gmra.mrb[0].mxu0 %v1625
    %v1693 = vpop.f32.mrb[0].mxu0
    %v1694 = vadd.f32 0.0, %v1693
    %v1695 = vpop.f32.mrb[0].mxu0
    %1696 = vdwg.mxu0
    %v1697 = vmul.f32 %v1621, %v1380
    %v1698 = vmul.f32 %v1694, %v1380
    %v1699 = vadd.f32 %v1375, %v1697
    %v1700 = vadd.f32 %v1376, %v1698
    %v1701 = vld [vmem:[#allocation11] sm:$0xff]
    %v1702 = vld [vmem:[#allocation11 + $0x8] sm:$0xff]
    %v1703 = vld [vmem:[#allocation11 + $0x10] sm:$0xff]
    %v1704 = vld [vmem:[#allocation11 + $0x18] sm:$0xff]
    %v1705 = vld [vmem:[#allocation13] sm:$0x1]
    %v1707 = vlaneseq
    %v1708 = vshrl.u32 %v1707, 7
    %v1709 = vsub.s32 0, %v1708
    %v1710 = vrot.slane %v1705, %v1709
    %v1713 = vsel %vm140, %v1699, 0
    %v1716 = vsel %vm140, %v1700, 0
    %1718 = vmatprep.subr.mxu0 0.0
    %1719 = vmatpush1.msra.mxu0 %v1701
    %1720 = vmatprep.subr.mxu0 0.0
    %1721 = vmatpush1.msra.mxu0 %v1702
    %1722 = vmatprep.subr.mxu0 0.0
    %1723 = vmatpush1.msra.mxu0 %v1703
    %1724 = vmatprep.subr.mxu0 0.0
    %1725 = vmatpush1.msra.mxu0 %v1704
    %1726 = vmatprep.subr.mxu0 0.0
    %1727 = vmatpush1.msra.mxu0 0.0
    %1728 = vmatprep.subr.mxu0 0.0
    %1729 = vmatpush1.msra.mxu0 0.0
    %1730 = vmatprep.subr.mxu0 0.0
    %1731 = vmatpush1.msra.mxu0 0.0
    %1732 = vmatprep.subr.mxu0 0.0
    %1733 = vmatpush1.msra.mxu0 0.0
    %1734 = vmatprep.subr.mxu0 0.0
    %1735 = vmatpush1.msra.mxu0 0.0
    %1736 = vmatprep.subr.mxu0 0.0
    %1737 = vmatpush1.msra.mxu0 0.0
    %1738 = vmatprep.subr.mxu0 0.0
    %1739 = vmatpush1.msra.mxu0 0.0
    %1740 = vmatprep.subr.mxu0 0.0
    %1741 = vmatpush1.msra.mxu0 0.0
    %1742 = vmatprep.subr.mxu0 0.0
    %1743 = vmatpush1.msra.mxu0 0.0
    %1744 = vmatprep.subr.mxu0 0.0
    %1745 = vmatpush1.msra.mxu0 0.0
    %1746 = vmatprep.subr.mxu0 0.0
    %1747 = vmatpush1.msra.mxu0 0.0
    %1748 = vmatprep.subr.mxu0 0.0
    %1749 = vmatpush1.msra.mxu0 0.0
    %1750 = vmatprep.subr.mxu0 0.0
    %1751 = vmatpush1.msra.mxu0 0.0
    %1752 = vmatprep.subr.mxu0 0.0
    %1753 = vmatpush1.msra.mxu0 0.0
    %1754 = vmatprep.subr.mxu0 0.0
    %1755 = vmatpush1.msra.mxu0 0.0
    %1756 = vmatprep.subr.mxu0 0.0
    %1757 = vmatpush1.msra.mxu0 0.0
    %1758 = vmatprep.subr.mxu0 0.0
    %1759 = vmatpush1.msra.mxu0 0.0
    %1760 = vmatprep.subr.mxu0 0.0
    %1761 = vmatpush1.msra.mxu0 0.0
    %1762 = vmatprep.subr.mxu0 0.0
    %1763 = vmatpush1.msra.mxu0 0.0
    %1764 = vmatprep.subr.mxu0 0.0
    %1765 = vmatpush1.msra.mxu0 0.0
    %1766 = vmatprep.subr.mxu0 0.0
    %1767 = vmatpush1.msra.mxu0 0.0
    %1768 = vmatprep.subr.mxu0 0.0
    %1769 = vmatpush1.msra.mxu0 0.0
    %1770 = vmatprep.subr.mxu0 0.0
    %1771 = vmatpush1.msra.mxu0 0.0
    %1772 = vmatprep.subr.mxu0 0.0
    %1773 = vmatpush1.msra.mxu0 0.0
    %1774 = vmatprep.subr.mxu0 0.0
    %1775 = vmatpush1.msra.mxu0 0.0
    %1776 = vmatprep.subr.mxu0 0.0
    %1777 = vmatpush1.msra.mxu0 0.0
    %1778 = vmatprep.subr.mxu0 0.0
    %1779 = vmatpush1.msra.mxu0 0.0
    %1780 = vmatprep.subr.mxu0 0.0
    %1781 = vmatpush1.msra.mxu0 0.0
    %1782 = vmatprep.mubr.f32.mxu0 0.0
    %1783 = vmatmul.mubr.f32.gmra.mrb[0].mxu0 %v1713
    %v1784 = vpop.f32.mrb[0].mxu0
    %v1785 = vadd.f32 %v1710, %v1784
    %v1786 = vpop.f32.mrb[0].mxu0
    %1787 = vmatprep.mubr.f32.mxu0 0.0
    %1788 = vmatmul.mubr.f32.gmra.mrb[0].mxu0 %v1716
    %v1789 = vpop.f32.mrb[0].mxu0
    %v1790 = vadd.f32 %v1710, %v1789
    %v1791 = vpop.f32.mrb[0].mxu0
    %1792 = vdwg.mxu0
    %v1793 = vadd.f32 %v1785, %v127
    %v1794 = vadd.f32 %v1790, %v128
    %v1795 = vld [vmem:[%s9] sm:$0xff]
    %v1796 = vld [vmem:[%s9 + $0x8] sm:$0xff]
    %v1797 = vld [vmem:[%s9 + $0x10] sm:$0xff]
    %v1798 = vld [vmem:[%s9 + $0x18] sm:$0xff]
    %v1800 = vsel %vm140, %v1793, 0
    %v1803 = vsel %vm140, %v1794, 0
    %1805 = vmatprep.subr.mxu0 0.0
    %1806 = vmatpush1.msra.mxu0 %v1795
    %1807 = vmatprep.subr.mxu0 0.0
    %1808 = vmatpush1.msra.mxu0 %v1796
    %1809 = vmatprep.subr.mxu0 0.0
    %1810 = vmatpush1.msra.mxu0 %v1797
    %1811 = vmatprep.subr.mxu0 0.0
    %1812 = vmatpush1.msra.mxu0 %v1798
    %1813 = vmatprep.subr.mxu0 0.0
    %1814 = vmatpush1.msra.mxu0 0.0
    %1815 = vmatprep.subr.mxu0 0.0
    %1816 = vmatpush1.msra.mxu0 0.0
    %1817 = vmatprep.subr.mxu0 0.0
    %1818 = vmatpush1.msra.mxu0 0.0
    %1819 = vmatprep.subr.mxu0 0.0
    %1820 = vmatpush1.msra.mxu0 0.0
    %1821 = vmatprep.subr.mxu0 0.0
    %1822 = vmatpush1.msra.mxu0 0.0
    %1823 = vmatprep.subr.mxu0 0.0
    %1824 = vmatpush1.msra.mxu0 0.0
    %1825 = vmatprep.subr.mxu0 0.0
    %1826 = vmatpush1.msra.mxu0 0.0
    %1827 = vmatprep.subr.mxu0 0.0
    %1828 = vmatpush1.msra.mxu0 0.0
    %1829 = vmatprep.subr.mxu0 0.0
    %1830 = vmatpush1.msra.mxu0 0.0
    %1831 = vmatprep.subr.mxu0 0.0
    %1832 = vmatpush1.msra.mxu0 0.0
    %1833 = vmatprep.subr.mxu0 0.0
    %1834 = vmatpush1.msra.mxu0 0.0
    %1835 = vmatprep.subr.mxu0 0.0
    %1836 = vmatpush1.msra.mxu0 0.0
    %1837 = vmatprep.subr.mxu0 0.0
    %1838 = vmatpush1.msra.mxu0 0.0
    %1839 = vmatprep.subr.mxu0 0.0
    %1840 = vmatpush1.msra.mxu0 0.0
    %1841 = vmatprep.subr.mxu0 0.0
    %1842 = vmatpush1.msra.mxu0 0.0
    %1843 = vmatprep.subr.mxu0 0.0
    %1844 = vmatpush1.msra.mxu0 0.0
    %1845 = vmatprep.subr.mxu0 0.0
    %1846 = vmatpush1.msra.mxu0 0.0
    %1847 = vmatprep.subr.mxu0 0.0
    %1848 = vmatpush1.msra.mxu0 0.0
    %1849 = vmatprep.subr.mxu0 0.0
    %1850 = vmatpush1.msra.mxu0 0.0
    %1851 = vmatprep.subr.mxu0 0.0
    %1852 = vmatpush1.msra.mxu0 0.0
    %1853 = vmatprep.subr.mxu0 0.0
    %1854 = vmatpush1.msra.mxu0 0.0
    %1855 = vmatprep.subr.mxu0 0.0
    %1856 = vmatpush1.msra.mxu0 0.0
    %1857 = vmatprep.subr.mxu0 0.0
    %1858 = vmatpush1.msra.mxu0 0.0
    %1859 = vmatprep.subr.mxu0 0.0
    %1860 = vmatpush1.msra.mxu0 0.0
    %1861 = vmatprep.subr.mxu0 0.0
    %1862 = vmatpush1.msra.mxu0 0.0
    %1863 = vmatprep.subr.mxu0 0.0
    %1864 = vmatpush1.msra.mxu0 0.0
    %1865 = vmatprep.subr.mxu0 0.0
    %1866 = vmatpush1.msra.mxu0 0.0
    %1867 = vmatprep.subr.mxu0 0.0
    %1868 = vmatpush1.msra.mxu0 0.0
    %1869 = vmatprep.mubr.f32.mxu0 0.0
    %1870 = vmatmul.mubr.f32.gmra.mrb[0].mxu0 %v1800
    %v1871 = vpop.f32.mrb[0].mxu0
    %v1872 = vadd.f32 %v1793, %v1871
    %v1873 = vpop.f32.mrb[0].mxu0
    %1874 = vmatprep.mubr.f32.mxu0 0.0
    %1875 = vmatmul.mubr.f32.gmra.mrb[0].mxu0 %v1803
    %v1876 = vpop.f32.mrb[0].mxu0
    %v1877 = vadd.f32 %v1794, %v1876
    %v1878 = vpop.f32.mrb[0].mxu0
    %1879 = vdwg.mxu0
    %1880 = vst.msk [vmem:[#allocation14] sm:$0xff] %vm140, %v1872
    %1881 = vst.msk [vmem:[#allocation14 + $0x8] sm:$0xff] %vm140, %v1877
    // Predicated region
    $region70: #{tpu_custom_call.1} parent=1 // pred_check
      _
    $region71: #{tpu_custom_call.1} parent=1 // pred_check_branch
      %1883 = sbr.rel (0) target = $region73
    $region72: #{tpu_custom_call.1} parent=1 // pred_region
      %s1885 = ssub.s32 256, 256
      %1886 = vsyncadd [#allocation4], %s1885
      %s1887 = sshll.u32 [#allocation14], 4
      %s1888 = int_to_ptr.vmem [resolvable:$true] %s1887
      %1893 = dma.vmem_to_hbm [thread:$0]  %s1888, 256, %s10, [#allocation4], 128, 128, 8
    $region73: #{tpu_custom_call.1} parent=1 // pred_fallthru
      _
    // Predicated region
    $region74: #{tpu_custom_call.1} parent=1 // pred_check
      _
    $region75: #{tpu_custom_call.1} parent=1 // pred_check_branch
      %1895 = sbr.rel (0) target = $region77
    $region76: #{tpu_custom_call.1} parent=1 // pred_region
      %1896 = dma.done [#allocation4], 256
    $region77: #{tpu_custom_call.1} parent=1 // pred_fallthru
      _
    %1897 = vsyncpa [#allocation3], 1
    %1898 = vsyncpa [#allocation6], 1
    %1899 = vsyncpa [#allocation9], 1
    %1900 = vsyncpa [#allocation12], 1
    %1901 = vsyncpa [#allocation4], 1

</llo_original>
